<compile_context>
chip_gen: v5e
topology: v5e:2x2
jax: 0.10.0
libtpu: 0.0.40
codegen_flags: <defaults>
</compile_context>

<pallas_src>
import jax
import jax.numpy as jnp
import numpy as np
from jax import lax
from jax.experimental import pallas as pl
from jax.experimental.pallas import tpu as pltpu

EPS = 1e-5
LANE = 128
SUB = 8
VMEM_LIMIT = 48 * 1024 * 1024  # <= v7x physical 64 MiB; ample on v5e/v6e.


def _round_up(x, m):
    return (x + m - 1) // m * m


def _compiler_params():
    return pltpu.CompilerParams(
        dimension_semantics=("parallel",),
        vmem_limit_bytes=VMEM_LIMIT,
    )


# ---------------------------------------------------------------------------
# Pallas kernels
# ---------------------------------------------------------------------------
def _make_conv_in_kernel(l1, l1_pad, stride, cw):
    """Conv over the (time-padded) input x: taps formed in-kernel, fused BN stats.

    x_ref : (tin_pad, cin_p) f32   channels-last input, row 0 = left zero pad
    w_ref : (3, cin_p, cw)  bf16   per-tap weights ([w1 | w_shortcut] if fused)
    y_ref : (l1_pad, cw)    bf16   conv output (rows >= l1 forced to 0)
    s_ref/q_ref : (8, cw)   f32    per-batch column sum / sum-of-squares
    """
    def kernel(x_ref, w_ref, y_ref, s_ref, q_ref):
        def tap(k):
            if stride == 1:
                t = x_ref[pl.ds(k, l1_pad), :]
            else:
                t = x_ref[pl.ds(k, l1_pad, stride=stride), :]
            return t.astype(jnp.bfloat16)

        acc = jnp.dot(tap(0), w_ref[0], preferred_element_type=jnp.float32)
        acc = acc + jnp.dot(tap(1), w_ref[1], preferred_element_type=jnp.float32)
        acc = acc + jnp.dot(tap(2), w_ref[2], preferred_element_type=jnp.float32)
        rows = lax.broadcasted_iota(jnp.int32, (l1_pad, 1), 0)
        acc = jnp.where(rows < l1, acc, 0.0)          # keep pad rows exactly 0 (stats!)
        y_ref[...] = acc.astype(y_ref.dtype)
        s_ref[...] = jnp.broadcast_to(jnp.sum(acc, 0, keepdims=True), s_ref.shape)
        q_ref[...] = jnp.broadcast_to(jnp.sum(acc * acc, 0, keepdims=True), q_ref.shape)

    return kernel


def _make_conv_mid_kernel(l1, l1_pad):
    """conv2 with BN1+ReLU fused into the prologue (no h round trip).

    y1_ref : (l1_pad, cout_p) bf16 conv1 output
    a1/b1  : (1, cout_p)      f32  folded BN1 scale / shift
    w_ref  : (3, cout_p, cout_p) bf16
    """
    def kernel(y1_ref, a1_ref, b1_ref, w_ref, y_ref, s_ref, q_ref):
        rows = lax.broadcasted_iota(jnp.int32, (l1_pad, 1), 0)
        h = jnp.maximum(y1_ref[...].astype(jnp.float32) * a1_ref[...] + b1_ref[...], 0.0)
        h = jnp.where(rows < l1, h, 0.0)
        # taps over the zero-padded h: tap_k[t] = h[t + k - 1]
        tap0 = jnp.where(rows >= 1, pltpu.roll(h, 1, 0), 0.0).astype(jnp.bfloat16)
        tap1 = h.astype(jnp.bfloat16)
        tap2 = jnp.where(rows + 1 < l1, pltpu.roll(h, l1_pad - 1, 0), 0.0).astype(jnp.bfloat16)
        acc = jnp.dot(tap0, w_ref[0], preferred_element_type=jnp.float32)
        acc = acc + jnp.dot(tap1, w_ref[1], preferred_element_type=jnp.float32)
        acc = acc + jnp.dot(tap2, w_ref[2], preferred_element_type=jnp.float32)
        acc = jnp.where(rows < l1, acc, 0.0)
        y_ref[...] = acc.astype(y_ref.dtype)
        s_ref[...] = jnp.broadcast_to(jnp.sum(acc, 0, keepdims=True), s_ref.shape)
        q_ref[...] = jnp.broadcast_to(jnp.sum(acc * acc, 0, keepdims=True), q_ref.shape)

    return kernel


def _epi_conv_sc_kernel(y2_ref, ysc_ref, a2_ref, b2_ref, as_ref, bs_ref, o_ref):
    # o = relu(BN2(y2) + BN_s(y_shortcut))
    o = (y2_ref[...].astype(jnp.float32) * a2_ref[...] + b2_ref[...]
         + ysc_ref[...].astype(jnp.float32) * as_ref[...] + bs_ref[...])
    o_ref[...] = jnp.maximum(o, 0.0).astype(o_ref.dtype)


def _make_epi_identity_kernel(l1_pad):
    def kernel(y2_ref, x_ref, a2_ref, b2_ref, o_ref):
        # o = relu(BN2(y2) + x)   (skip x's baked-in left pad row)
        res = x_ref[pl.ds(1, l1_pad), :]
        o = y2_ref[...].astype(jnp.float32) * a2_ref[...] + b2_ref[...] + res
        o_ref[...] = jnp.maximum(o, 0.0).astype(o_ref.dtype)

    return kernel


# ---------------------------------------------------------------------------
# pallas_call wrappers
# ---------------------------------------------------------------------------
def _conv_input_call(x_in, w3, n, l1, l1_pad, tin_pad, stride):
    cin_p = x_in.shape[1]
    cw = w3.shape[2]
    y, s, q = pl.pallas_call(
        _make_conv_in_kernel(l1, l1_pad, stride, cw),
        out_shape=(
            jax.ShapeDtypeStruct((n * l1_pad, cw), jnp.bfloat16),
            jax.ShapeDtypeStruct((n * SUB, cw), jnp.float32),
            jax.ShapeDtypeStruct((n * SUB, cw), jnp.float32),
        ),
        grid=(n,),
        in_specs=[
            pl.BlockSpec((tin_pad, cin_p), lambda i: (i, 0)),
            pl.BlockSpec((3, cin_p, cw), lambda i: (0, 0, 0)),
        ],
        out_specs=(
            pl.BlockSpec((l1_pad, cw), lambda i: (i, 0)),
            pl.BlockSpec((SUB, cw), lambda i: (i, 0)),
            pl.BlockSpec((SUB, cw), lambda i: (i, 0)),
        ),
        compiler_params=_compiler_params(),
    )(x_in, w3)
    ssum = jnp.sum(s.reshape(n, SUB, cw)[:, 0, :], axis=0)
    sqsum = jnp.sum(q.reshape(n, SUB, cw)[:, 0, :], axis=0)
    return y, ssum, sqsum


def _conv_mid_call(y1f, a1, b1, w3, n, l1, l1_pad, cout_p):
    y, s, q = pl.pallas_call(
        _make_conv_mid_kernel(l1, l1_pad),
        out_shape=(
            jax.ShapeDtypeStruct((n * l1_pad, cout_p), jnp.bfloat16),
            jax.ShapeDtypeStruct((n * SUB, cout_p), jnp.float32),
            jax.ShapeDtypeStruct((n * SUB, cout_p), jnp.float32),
        ),
        grid=(n,),
        in_specs=[
            pl.BlockSpec((l1_pad, cout_p), lambda i: (i, 0)),   # conv1 half of y1f
            pl.BlockSpec((1, cout_p), lambda i: (0, 0)),
            pl.BlockSpec((1, cout_p), lambda i: (0, 0)),
            pl.BlockSpec((3, cout_p, cout_p), lambda i: (0, 0, 0)),
        ],
        out_specs=(
            pl.BlockSpec((l1_pad, cout_p), lambda i: (i, 0)),
            pl.BlockSpec((SUB, cout_p), lambda i: (i, 0)),
            pl.BlockSpec((SUB, cout_p), lambda i: (i, 0)),
        ),
        compiler_params=_compiler_params(),
    )(y1f, a1, b1, w3)
    ssum = jnp.sum(s.reshape(n, SUB, cout_p)[:, 0, :], axis=0)
    sqsum = jnp.sum(q.reshape(n, SUB, cout_p)[:, 0, :], axis=0)
    return y, ssum, sqsum


def _epi_conv_sc_call(y2, y1f, a2, b2, a_s, b_s, n, l1_pad, cout_p):
    return pl.pallas_call(
        _epi_conv_sc_kernel,
        out_shape=jax.ShapeDtypeStruct((n * l1_pad, cout_p), jnp.float32),
        grid=(n,),
        in_specs=[
            pl.BlockSpec((l1_pad, cout_p), lambda i: (i, 0)),
            pl.BlockSpec((l1_pad, cout_p), lambda i: (i, 1)),   # shortcut half of y1f
            pl.BlockSpec((1, cout_p), lambda i: (0, 0)),
            pl.BlockSpec((1, cout_p), lambda i: (0, 0)),
            pl.BlockSpec((1, cout_p), lambda i: (0, 0)),
            pl.BlockSpec((1, cout_p), lambda i: (0, 0)),
        ],
        out_specs=pl.BlockSpec((l1_pad, cout_p), lambda i: (i, 0)),
        compiler_params=_compiler_params(),
    )(y2, y1f, a2, b2, a_s, b_s)


def _epi_identity_call(y2, x_in, a2, b2, n, l1_pad, tin_pad, cout_p):
    return pl.pallas_call(
        _make_epi_identity_kernel(l1_pad),
        out_shape=jax.ShapeDtypeStruct((n * l1_pad, cout_p), jnp.float32),
        grid=(n,),
        in_specs=[
            pl.BlockSpec((l1_pad, cout_p), lambda i: (i, 0)),
            pl.BlockSpec((tin_pad, cout_p), lambda i: (i, 0)),
            pl.BlockSpec((1, cout_p), lambda i: (0, 0)),
            pl.BlockSpec((1, cout_p), lambda i: (0, 0)),
        ],
        out_specs=pl.BlockSpec((l1_pad, cout_p), lambda i: (i, 0)),
        compiler_params=_compiler_params(),
    )(y2, x_in, a2, b2)


# ---------------------------------------------------------------------------
# Thin XLA glue (layout prep, tiny BN finalization)
# ---------------------------------------------------------------------------
def _prep_weight(w, cin_p, cout_p):
    """PyTorch Conv1d weight (C_out, C_in, 3) -> (3, cin_p, cout_p) bf16."""
    k3 = jnp.transpose(w, (2, 1, 0))
    k3 = jnp.pad(k3, ((0, 0), (0, cin_p - k3.shape[1]), (0, cout_p - k3.shape[2])))
    return k3.astype(jnp.bfloat16)


def _bn_affine(ssum, sqsum, count, gamma, beta):
    """Fold training-mode BN (batch stats) into per-channel y*a + b (lane-padded).

    Correctness note: relies on pad rows / pad channels of the conv output
    being exactly zero (enforced by the in-kernel row mask and zero weight
    padding); count is the number of *valid* rows (N * L_out).
    """
    cp = ssum.shape[0]
    mean = ssum / count
    var = jnp.maximum(sqsum / count - mean * mean, 0.0)
    g = jnp.pad(gamma, (0, cp - gamma.shape[0]))
    b = jnp.pad(beta, (0, cp - beta.shape[0]))
    a = g * lax.rsqrt(var + EPS)
    return a[None, :], (b - a * mean)[None, :]


# ---------------------------------------------------------------------------
# ResBlock1 forward
# ---------------------------------------------------------------------------
def resblock1_forward(x, params, stride):
    """x: (N, C_in, L) float32 -> (N, C_out, L_out) float32."""
    n, c_in, l = x.shape
    c_out = params["w1"].shape[0]
    l1 = (l - 1) // stride + 1
    cin_p = _round_up(c_in, LANE)
    cout_p = _round_up(c_out, LANE)
    l1_pad = _round_up(l1, SUB)
    tin_pad = _round_up((l1_pad - 1) * stride + 3, SUB)
    use_conv_sc = (c_in != c_out) or (stride > 1)
    cw = 2 * cout_p if use_conv_sc else cout_p
    count = n * l1

    # Channels-last, lane-padded, time-padded input; row 0 of each batch
    # element is the conv's left zero pad.  Kept f32 so it also serves as the
    # identity residual; the conv kernel casts taps to bf16 on-chip.
    x_nlc = jnp.transpose(x, (0, 2, 1))
    x_in = jnp.pad(x_nlc, ((0, 0), (1, tin_pad - 1 - l), (0, cin_p - c_in)))
    x_in = x_in.reshape(n * tin_pad, cin_p)

    # ---- conv1 (+ conv shortcut fused along output channels) + BN stats ----
    w1 = _prep_weight(params["w1"], cin_p, cout_p)
    if use_conv_sc:
        wfused = jnp.concatenate([w1, _prep_weight(params["ws"], cin_p, cout_p)], axis=2)
    else:
        wfused = w1
    y1f, s1f, q1f = _conv_input_call(x_in, wfused, n, l1, l1_pad, tin_pad, stride)
    a1, b1 = _bn_affine(s1f[:cout_p], q1f[:cout_p], count, params["g1"], params["be1"])

    # ---- conv2 with BN1+ReLU fused into its prologue, + BN2 stats ----
    w2 = _prep_weight(params["w2"], cout_p, cout_p)
    y2, s2, q2 = _conv_mid_call(y1f, a1, b1, w2, n, l1, l1_pad, cout_p)
    a2, b2 = _bn_affine(s2, q2, count, params["g2"], params["be2"])

    # ---- fused BN(+BN) + residual add + ReLU epilogue ----
    if use_conv_sc:
        a_s, b_s = _bn_affine(s1f[cout_p:], q1f[cout_p:], count, params["gs"], params["bes"])
        out = _epi_conv_sc_call(y2, y1f, a2, b2, a_s, b_s, n, l1_pad, cout_p)
    else:
        out = _epi_identity_call(y2, x_in, a2, b2, n, l1_pad, tin_pad, cout_p)

    out = out.reshape(n, l1_pad, cout_p)[:, :l1, :c_out]
    # XLA fuses this slice + NLC->NCL transpose into a single copy pass.
    return jnp.transpose(out, (0, 2, 1))


# ---------------------------------------------------------------------------
# Pure-JAX reference (mirrors the PyTorch forward in training mode; convs use
# bf16 operands with f32 accumulation like the kernels; conv biases are kept
# to verify the kernel-side bias-drop / BN-mean cancellation).
# ---------------------------------------------------------------------------
def _conv_ref(x, w, b, stride):
    y = lax.conv_general_dilated(
        x.astype(jnp.bfloat16), w.astype(jnp.bfloat16),
        window_strides=(stride,), padding=((1, 1),),
        dimension_numbers=("NCH", "OIH", "NCH"),
        preferred_element_type=jnp.float32)
    return y + b[None, :, None]


def _bn_ref(y, g, b):
    m = y.mean(axis=(0, 2), keepdims=True)
    v = ((y - m) ** 2).mean(axis=(0, 2), keepdims=True)
    return (y - m) / jnp.sqrt(v + EPS) * g[None, :, None] + b[None, :, None]


def resblock1_ref(x, p, stride):
    c_in, c_out = x.shape[1], p["w1"].shape[0]
    h = jax.nn.relu(_bn_ref(_conv_ref(x, p["w1"], p["b1"], stride), p["g1"], p["be1"]))
    o1 = _bn_ref(_conv_ref(h, p["w2"], p["b2"], 1), p["g2"], p["be2"])
    if c_in != c_out or stride > 1:
        o2 = _bn_ref(_conv_ref(x, p["ws"], p["bs"], stride), p["gs"], p["bes"])
    else:
        o2 = x
    return jax.nn.relu(o1 + o2)


# ---------------------------------------------------------------------------
# Parameter init + main
# ---------------------------------------------------------------------------
def init_params(key, c_in, c_out):
    ks = jax.random.split(key, 12)
    n = lambda k, s, sc=0.1: sc * jax.random.normal(k, s, jnp.float32)
    return {
        "w1": n(ks[0], (c_out, c_in, 3)),  "b1": n(ks[1], (c_out,)),
        "g1": 1.0 + n(ks[2], (c_out,)),    "be1": n(ks[3], (c_out,)),
        "w2": n(ks[4], (c_out, c_out, 3)), "b2": n(ks[5], (c_out,)),
        "g2": 1.0 + n(ks[6], (c_out,)),    "be2": n(ks[7], (c_out,)),
        "ws": n(ks[8], (c_out, c_in, 3)),  "bs": n(ks[9], (c_out,)),
        "gs": 1.0 + n(ks[10], (c_out,)),   "bes": n(ks[11], (c_out,)),
    }


if __name__ == "__main__":
    key = jax.random.PRNGKey(0)
    kx1, kx2, kx3, kp1, kp2, kp3 = jax.random.split(key, 6)

    fwd = jax.jit(resblock1_forward, static_argnums=2)

    # Tolerance note: BN statistics are accumulated in f32 inside the conv
    # kernels, but the conv outputs (y1 | y_shortcut, y2) are now stored in
    # bf16 (per perf review) while the reference keeps them in f32, so the
    # BN2/BN_shortcut scale (~1/sigma) amplifies the bf16 storage rounding to
    # ~1e-2 worst-case absolute error on the final output.
    RTOL = ATOL = 3e-2

    # Case A: C_in != C_out, stride 1 -> fused conv-shortcut branch.
    N, C_in, C_out, L = 2, 4, 8, 16
    x_a = jax.random.normal(kx1, (N, C_in, L), jnp.float32)
    p_a = init_params(kp1, C_in, C_out)
    out_a = jax.block_until_ready(fwd(x_a, p_a, 1))
    ref_a = jax.block_until_ready(resblock1_ref(x_a, p_a, 1))
    assert out_a.shape == (N, C_out, L)
    np.testing.assert_allclose(np.asarray(out_a), np.asarray(ref_a), rtol=RTOL, atol=ATOL)

    # Case B: C_in == C_out, stride 1 -> identity shortcut branch.
    x_b = jax.random.normal(kx2, (N, C_in, L), jnp.float32)
    p_b = init_params(kp2, C_in, C_in)
    out_b = jax.block_until_ready(fwd(x_b, p_b, 1))
    ref_b = jax.block_until_ready(resblock1_ref(x_b, p_b, 1))
    assert out_b.shape == (N, C_in, L)
    np.testing.assert_allclose(np.asarray(out_b), np.asarray(ref_b), rtol=RTOL, atol=ATOL)

    # Case C: strided conv shortcut (stride 2) -> strided in-kernel taps.
    x_c = jax.random.normal(kx3, (N, C_in, L), jnp.float32)
    p_c = init_params(kp3, C_in, C_out)
    out_c = jax.block_until_ready(fwd(x_c, p_c, 2))
    ref_c = jax.block_until_ready(resblock1_ref(x_c, p_c, 2))
    assert out_c.shape == (N, C_out, L // 2)
    np.testing.assert_allclose(np.asarray(out_c), np.asarray(ref_c), rtol=RTOL, atol=ATOL)

    print("KERNEL_OK")
</pallas_src>

<mosaic_0001>
module attributes {stable_mosaic.version = 11 : i64} {
  func.func @kernel(%arg0: i32, %arg1: memref<24x128xf32, #tpu.memory_space<vmem>>, %arg2: memref<3x128x256xbf16, #tpu.memory_space<vmem>>, %arg3: memref<16x256xbf16, #tpu.memory_space<vmem>>, %arg4: memref<8x256xf32, #tpu.memory_space<vmem>>, %arg5: memref<8x256xf32, #tpu.memory_space<vmem>>) attributes {dimension_semantics = [#tpu.dimension_semantics<parallel>], iteration_bounds = array<i64: 2>, scalar_prefetch = 0 : i64, scratch_operands = 0 : i64, tpu.core_type = #tpu.core_type<tc>, window_params = [{transform_indices = @transform_0, window_bounds = array<i64: 24, 128>}, {pipeline_mode = #tpu.pipeline_mode<synchronous>, transform_indices = @transform_1, window_bounds = array<i64: 3, 128, 256>}, {transform_indices = @transform_2, window_bounds = array<i64: 16, 256>}, {transform_indices = @transform_3, window_bounds = array<i64: 8, 256>}, {transform_indices = @transform_4, window_bounds = array<i64: 8, 256>}]} {
    %c0 = arith.constant 0 : index
    %c0_0 = arith.constant 0 : index
    %0 = vector.load %arg1[%c0, %c0_0] : memref<24x128xf32, #tpu.memory_space<vmem>>, vector<16x128xf32>
    %1 = arith.truncf %0 : vector<16x128xf32> to vector<16x128xbf16>
    %c0_1 = arith.constant 0 : index
    %c0_2 = arith.constant 0 : index
    %c0_3 = arith.constant 0 : index
    %2 = vector.load %arg2[%c0_1, %c0_2, %c0_3] : memref<3x128x256xbf16, #tpu.memory_space<vmem>>, vector<1x128x256xbf16>
    %3 = vector.shape_cast %2 : vector<1x128x256xbf16> to vector<128x256xbf16>
    %cst = arith.constant dense<0.000000e+00> : vector<16x256xf32>
    %4 = tpu.matmul %1, %3, %cst {dimension_numbers = #tpu.dot_dimension_numbers<[1], [0], [0], [1], [0, 0, 1, 1], [], []>} : vector<16x128xbf16>, vector<128x256xbf16>, vector<16x256xf32> -> vector<16x256xf32>
    %c1 = arith.constant 1 : index
    %c0_4 = arith.constant 0 : index
    %5 = vector.load %arg1[%c1, %c0_4] : memref<24x128xf32, #tpu.memory_space<vmem>>, vector<16x128xf32>
    %6 = arith.truncf %5 : vector<16x128xf32> to vector<16x128xbf16>
    %c1_5 = arith.constant 1 : index
    %c0_6 = arith.constant 0 : index
    %c0_7 = arith.constant 0 : index
    %7 = vector.load %arg2[%c1_5, %c0_6, %c0_7] : memref<3x128x256xbf16, #tpu.memory_space<vmem>>, vector<1x128x256xbf16>
    %8 = vector.shape_cast %7 : vector<1x128x256xbf16> to vector<128x256xbf16>
    %cst_8 = arith.constant dense<0.000000e+00> : vector<16x256xf32>
    %9 = tpu.matmul %6, %8, %cst_8 {dimension_numbers = #tpu.dot_dimension_numbers<[1], [0], [0], [1], [0, 0, 1, 1], [], []>} : vector<16x128xbf16>, vector<128x256xbf16>, vector<16x256xf32> -> vector<16x256xf32>
    %10 = arith.addf %4, %9 : vector<16x256xf32>
    %c2 = arith.constant 2 : index
    %c0_9 = arith.constant 0 : index
    %11 = vector.load %arg1[%c2, %c0_9] : memref<24x128xf32, #tpu.memory_space<vmem>>, vector<16x128xf32>
    %12 = arith.truncf %11 : vector<16x128xf32> to vector<16x128xbf16>
    %c2_10 = arith.constant 2 : index
    %c0_11 = arith.constant 0 : index
    %c0_12 = arith.constant 0 : index
    %13 = vector.load %arg2[%c2_10, %c0_11, %c0_12] : memref<3x128x256xbf16, #tpu.memory_space<vmem>>, vector<1x128x256xbf16>
    %14 = vector.shape_cast %13 : vector<1x128x256xbf16> to vector<128x256xbf16>
    %cst_13 = arith.constant dense<0.000000e+00> : vector<16x256xf32>
    %15 = tpu.matmul %12, %14, %cst_13 {dimension_numbers = #tpu.dot_dimension_numbers<[1], [0], [0], [1], [0, 0, 1, 1], [], []>} : vector<16x128xbf16>, vector<128x256xbf16>, vector<16x256xf32> -> vector<16x256xf32>
    %16 = arith.addf %10, %15 : vector<16x256xf32>
    %17 = tpu.iota {dimensions = array<i32: 0>} : vector<16x1xi32>
    %c16_i32 = arith.constant 16 : i32
    %18 = vector.broadcast %c16_i32 : i32 to vector<16x1xi32>
    %19 = arith.cmpi slt, %17, %18 : vector<16x1xi32>
    %cst_14 = arith.constant 0.000000e+00 : f32
    %20 = vector.shape_cast %19 : vector<16x1xi1> to vector<16x1xi1>
    %21 = vector.broadcast %20 : vector<16x1xi1> to vector<16x256xi1>
    %22 = vector.broadcast %cst_14 : f32 to vector<16x256xf32>
    %23 = arith.select %21, %16, %22 : vector<16x256xi1>, vector<16x256xf32>
    %24 = arith.truncf %23 : vector<16x256xf32> to vector<16x256xbf16>
    %c0_15 = arith.constant 0 : index
    %c0_16 = arith.constant 0 : index
    %25 = vector.load %arg3[%c0_15, %c0_16] : memref<16x256xbf16, #tpu.memory_space<vmem>>, vector<16x256xbf16>
    tpu.vector_store %arg3[%c0_15, %c0_16], %24 {strides = array<i32>} : memref<16x256xbf16, #tpu.memory_space<vmem>>, vector<16x256xbf16>,
    %cst_17 = arith.constant dense<0.000000e+00> : vector<256xf32>
    %26 = vector.multi_reduction <add>, %23, %cst_17 [0] : vector<16x256xf32> to vector<256xf32>
    %27 = vector.shape_cast %26 : vector<256xf32> to vector<1x256xf32>
    %28 = vector.shape_cast %27 : vector<1x256xf32> to vector<1x256xf32>
    %29 = vector.broadcast %28 : vector<1x256xf32> to vector<8x256xf32>
    %c0_18 = arith.constant 0 : index
    %c0_19 = arith.constant 0 : index
    %30 = vector.load %arg4[%c0_18, %c0_19] : memref<8x256xf32, #tpu.memory_space<vmem>>, vector<8x256xf32>
    tpu.vector_store %arg4[%c0_18, %c0_19], %29 {strides = array<i32>} : memref<8x256xf32, #tpu.memory_space<vmem>>, vector<8x256xf32>,
    %31 = arith.mulf %23, %23 : vector<16x256xf32>
    %cst_20 = arith.constant dense<0.000000e+00> : vector<256xf32>
    %32 = vector.multi_reduction <add>, %31, %cst_20 [0] : vector<16x256xf32> to vector<256xf32>
    %33 = vector.shape_cast %32 : vector<256xf32> to vector<1x256xf32>
    %34 = vector.shape_cast %33 : vector<1x256xf32> to vector<1x256xf32>
    %35 = vector.broadcast %34 : vector<1x256xf32> to vector<8x256xf32>
    %c0_21 = arith.constant 0 : index
    %c0_22 = arith.constant 0 : index
    %36 = vector.load %arg5[%c0_21, %c0_22] : memref<8x256xf32, #tpu.memory_space<vmem>>, vector<8x256xf32>
    tpu.vector_store %arg5[%c0_21, %c0_22], %35 {strides = array<i32>} : memref<8x256xf32, #tpu.memory_space<vmem>>, vector<8x256xf32>,
    return
  }
  func.func @transform_0(%arg0: i32) -> (i32, i32) {
    %c0_i32 = arith.constant 0 : i32
    %c0_i32_0 = arith.constant 0 : i32
    return %arg0, %c0_i32 : i32, i32
  }
  func.func @transform_1(%arg0: i32) -> (i32, i32, i32) {
    %c0_i32 = arith.constant 0 : i32
    %c0_i32_0 = arith.constant 0 : i32
    %c0_i32_1 = arith.constant 0 : i32
    %c0_i32_2 = arith.constant 0 : i32
    return %c0_i32, %c0_i32_0, %c0_i32_1 : i32, i32, i32
  }
  func.func @transform_2(%arg0: i32) -> (i32, i32) {
    %c0_i32 = arith.constant 0 : i32
    %c0_i32_0 = arith.constant 0 : i32
    return %arg0, %c0_i32 : i32, i32
  }
  func.func @transform_3(%arg0: i32) -> (i32, i32) {
    %c0_i32 = arith.constant 0 : i32
    %c0_i32_0 = arith.constant 0 : i32
    return %arg0, %c0_i32 : i32, i32
  }
  func.func @transform_4(%arg0: i32) -> (i32, i32) {
    %c0_i32 = arith.constant 0 : i32
    %c0_i32_0 = arith.constant 0 : i32
    return %arg0, %c0_i32 : i32, i32
  }
}

module attributes {stable_mosaic.version = 11 : i64} {
  func.func @kernel(%arg0: i32, %arg1: memref<16x128xbf16, #tpu.memory_space<vmem>>, %arg2: memref<1x128xf32, #tpu.memory_space<vmem>>, %arg3: memref<1x128xf32, #tpu.memory_space<vmem>>, %arg4: memref<3x128x128xbf16, #tpu.memory_space<vmem>>, %arg5: memref<16x128xbf16, #tpu.memory_space<vmem>>, %arg6: memref<8x128xf32, #tpu.memory_space<vmem>>, %arg7: memref<8x128xf32, #tpu.memory_space<vmem>>) attributes {dimension_semantics = [#tpu.dimension_semantics<parallel>], iteration_bounds = array<i64: 2>, scalar_prefetch = 0 : i64, scratch_operands = 0 : i64, tpu.core_type = #tpu.core_type<tc>, window_params = [{transform_indices = @transform_0, window_bounds = array<i64: 16, 128>}, {pipeline_mode = #tpu.pipeline_mode<synchronous>, transform_indices = @transform_1, window_bounds = array<i64: 1, 128>}, {pipeline_mode = #tpu.pipeline_mode<synchronous>, transform_indices = @transform_2, window_bounds = array<i64: 1, 128>}, {pipeline_mode = #tpu.pipeline_mode<synchronous>, transform_indices = @transform_3, window_bounds = array<i64: 3, 128, 128>}, {transform_indices = @transform_4, window_bounds = array<i64: 16, 128>}, {transform_indices = @transform_5, window_bounds = array<i64: 8, 128>}, {transform_indices = @transform_6, window_bounds = array<i64: 8, 128>}]} {
    %0 = tpu.iota {dimensions = array<i32: 0>} : vector<16x1xi32>
    %c0 = arith.constant 0 : index
    %c0_0 = arith.constant 0 : index
    %1 = vector.load %arg1[%c0, %c0_0] : memref<16x128xbf16, #tpu.memory_space<vmem>>, vector<16x128xbf16>
    %2 = arith.extf %1 : vector<16x128xbf16> to vector<16x128xf32>
    %c0_1 = arith.constant 0 : index
    %c0_2 = arith.constant 0 : index
    %3 = vector.load %arg2[%c0_1, %c0_2] : memref<1x128xf32, #tpu.memory_space<vmem>>, vector<1x128xf32>
    %4 = vector.broadcast %3 : vector<1x128xf32> to vector<16x128xf32>
    %5 = arith.mulf %2, %4 : vector<16x128xf32>
    %c0_3 = arith.constant 0 : index
    %c0_4 = arith.constant 0 : index
    %6 = vector.load %arg3[%c0_3, %c0_4] : memref<1x128xf32, #tpu.memory_space<vmem>>, vector<1x128xf32>
    %7 = vector.broadcast %6 : vector<1x128xf32> to vector<16x128xf32>
    %8 = arith.addf %5, %7 : vector<16x128xf32>
    %cst = arith.constant 0.000000e+00 : f32
    %9 = vector.broadcast %cst : f32 to vector<16x128xf32>
    %10 = arith.maximumf %8, %9 : vector<16x128xf32>
    %c16_i32 = arith.constant 16 : i32
    %11 = vector.broadcast %c16_i32 : i32 to vector<16x1xi32>
    %12 = arith.cmpi slt, %0, %11 : vector<16x1xi32>
    %cst_5 = arith.constant 0.000000e+00 : f32
    %13 = vector.shape_cast %12 : vector<16x1xi1> to vector<16x1xi1>
    %14 = vector.broadcast %13 : vector<16x1xi1> to vector<16x128xi1>
    %15 = vector.broadcast %cst_5 : f32 to vector<16x128xf32>
    %16 = arith.select %14, %10, %15 : vector<16x128xi1>, vector<16x128xf32>
    %c1_i32 = arith.constant 1 : i32
    %17 = vector.broadcast %c1_i32 : i32 to vector<16x1xi32>
    %18 = arith.cmpi sge, %0, %17 : vector<16x1xi32>
    %c1_i32_6 = arith.constant 1 : i32
    %19 = tpu.dynamic_rotate %16 by %c1_i32_6 dim 0 : vector<16x128xf32>, i32 -> vector<16x128xf32>
    %cst_7 = arith.constant 0.000000e+00 : f32
    %20 = vector.shape_cast %18 : vector<16x1xi1> to vector<16x1xi1>
    %21 = vector.broadcast %20 : vector<16x1xi1> to vector<16x128xi1>
    %22 = vector.broadcast %cst_7 : f32 to vector<16x128xf32>
    %23 = arith.select %21, %19, %22 : vector<16x128xi1>, vector<16x128xf32>
    %24 = arith.truncf %23 : vector<16x128xf32> to vector<16x128xbf16>
    %25 = arith.truncf %16 : vector<16x128xf32> to vector<16x128xbf16>
    %c1_i32_8 = arith.constant 1 : i32
    %26 = vector.broadcast %c1_i32_8 : i32 to vector<16x1xi32>
    %27 = arith.addi %0, %26 : vector<16x1xi32>
    %c16_i32_9 = arith.constant 16 : i32
    %28 = vector.broadcast %c16_i32_9 : i32 to vector<16x1xi32>
    %29 = arith.cmpi slt, %27, %28 : vector<16x1xi32>
    %c15_i32 = arith.constant 15 : i32
    %30 = tpu.dynamic_rotate %16 by %c15_i32 dim 0 : vector<16x128xf32>, i32 -> vector<16x128xf32>
    %cst_10 = arith.constant 0.000000e+00 : f32
    %31 = vector.shape_cast %29 : vector<16x1xi1> to vector<16x1xi1>
    %32 = vector.broadcast %31 : vector<16x1xi1> to vector<16x128xi1>
    %33 = vector.broadcast %cst_10 : f32 to vector<16x128xf32>
    %34 = arith.select %32, %30, %33 : vector<16x128xi1>, vector<16x128xf32>
    %35 = arith.truncf %34 : vector<16x128xf32> to vector<16x128xbf16>
    %c0_11 = arith.constant 0 : index
    %c0_12 = arith.constant 0 : index
    %c0_13 = arith.constant 0 : index
    %36 = vector.load %arg4[%c0_11, %c0_12, %c0_13] : memref<3x128x128xbf16, #tpu.memory_space<vmem>>, vector<1x128x128xbf16>
    %37 = vector.shape_cast %36 : vector<1x128x128xbf16> to vector<128x128xbf16>
    %cst_14 = arith.constant dense<0.000000e+00> : vector<16x128xf32>
    %38 = tpu.matmul %24, %37, %cst_14 {dimension_numbers = #tpu.dot_dimension_numbers<[1], [0], [0], [1], [0, 0, 1, 1], [], []>} : vector<16x128xbf16>, vector<128x128xbf16>, vector<16x128xf32> -> vector<16x128xf32>
    %c1 = arith.constant 1 : index
    %c0_15 = arith.constant 0 : index
    %c0_16 = arith.constant 0 : index
    %39 = vector.load %arg4[%c1, %c0_15, %c0_16] : memref<3x128x128xbf16, #tpu.memory_space<vmem>>, vector<1x128x128xbf16>
    %40 = vector.shape_cast %39 : vector<1x128x128xbf16> to vector<128x128xbf16>
    %cst_17 = arith.constant dense<0.000000e+00> : vector<16x128xf32>
    %41 = tpu.matmul %25, %40, %cst_17 {dimension_numbers = #tpu.dot_dimension_numbers<[1], [0], [0], [1], [0, 0, 1, 1], [], []>} : vector<16x128xbf16>, vector<128x128xbf16>, vector<16x128xf32> -> vector<16x128xf32>
    %42 = arith.addf %38, %41 : vector<16x128xf32>
    %c2 = arith.constant 2 : index
    %c0_18 = arith.constant 0 : index
    %c0_19 = arith.constant 0 : index
    %43 = vector.load %arg4[%c2, %c0_18, %c0_19] : memref<3x128x128xbf16, #tpu.memory_space<vmem>>, vector<1x128x128xbf16>
    %44 = vector.shape_cast %43 : vector<1x128x128xbf16> to vector<128x128xbf16>
    %cst_20 = arith.constant dense<0.000000e+00> : vector<16x128xf32>
    %45 = tpu.matmul %35, %44, %cst_20 {dimension_numbers = #tpu.dot_dimension_numbers<[1], [0], [0], [1], [0, 0, 1, 1], [], []>} : vector<16x128xbf16>, vector<128x128xbf16>, vector<16x128xf32> -> vector<16x128xf32>
    %46 = arith.addf %42, %45 : vector<16x128xf32>
    %c16_i32_21 = arith.constant 16 : i32
    %47 = vector.broadcast %c16_i32_21 : i32 to vector<16x1xi32>
    %48 = arith.cmpi slt, %0, %47 : vector<16x1xi32>
    %cst_22 = arith.constant 0.000000e+00 : f32
    %49 = vector.shape_cast %48 : vector<16x1xi1> to vector<16x1xi1>
    %50 = vector.broadcast %49 : vector<16x1xi1> to vector<16x128xi1>
    %51 = vector.broadcast %cst_22 : f32 to vector<16x128xf32>
    %52 = arith.select %50, %46, %51 : vector<16x128xi1>, vector<16x128xf32>
    %53 = arith.truncf %52 : vector<16x128xf32> to vector<16x128xbf16>
    %c0_23 = arith.constant 0 : index
    %c0_24 = arith.constant 0 : index
    %54 = vector.load %arg5[%c0_23, %c0_24] : memref<16x128xbf16, #tpu.memory_space<vmem>>, vector<16x128xbf16>
    tpu.vector_store %arg5[%c0_23, %c0_24], %53 {strides = array<i32>} : memref<16x128xbf16, #tpu.memory_space<vmem>>, vector<16x128xbf16>,
    %cst_25 = arith.constant dense<0.000000e+00> : vector<128xf32>
    %55 = vector.multi_reduction <add>, %52, %cst_25 [0] : vector<16x128xf32> to vector<128xf32>
    %56 = vector.shape_cast %55 : vector<128xf32> to vector<1x128xf32>
    %57 = vector.shape_cast %56 : vector<1x128xf32> to vector<1x128xf32>
    %58 = vector.broadcast %57 : vector<1x128xf32> to vector<8x128xf32>
    %c0_26 = arith.constant 0 : index
    %c0_27 = arith.constant 0 : index
    %59 = vector.load %arg6[%c0_26, %c0_27] : memref<8x128xf32, #tpu.memory_space<vmem>>, vector<8x128xf32>
    tpu.vector_store %arg6[%c0_26, %c0_27], %58 {strides = array<i32>} : memref<8x128xf32, #tpu.memory_space<vmem>>, vector<8x128xf32>,
    %60 = arith.mulf %52, %52 : vector<16x128xf32>
    %cst_28 = arith.constant dense<0.000000e+00> : vector<128xf32>
    %61 = vector.multi_reduction <add>, %60, %cst_28 [0] : vector<16x128xf32> to vector<128xf32>
    %62 = vector.shape_cast %61 : vector<128xf32> to vector<1x128xf32>
    %63 = vector.shape_cast %62 : vector<1x128xf32> to vector<1x128xf32>
    %64 = vector.broadcast %63 : vector<1x128xf32> to vector<8x128xf32>
    %c0_29 = arith.constant 0 : index
    %c0_30 = arith.constant 0 : index
    %65 = vector.load %arg7[%c0_29, %c0_30] : memref<8x128xf32, #tpu.memory_space<vmem>>, vector<8x128xf32>
    tpu.vector_store %arg7[%c0_29, %c0_30], %64 {strides = array<i32>} : memref<8x128xf32, #tpu.memory_space<vmem>>, vector<8x128xf32>,
    return
  }
  func.func @transform_0(%arg0: i32) -> (i32, i32) {
    %c0_i32 = arith.constant 0 : i32
    %c0_i32_0 = arith.constant 0 : i32
    return %arg0, %c0_i32 : i32, i32
  }
  func.func @transform_1(%arg0: i32) -> (i32, i32) {
    %c0_i32 = arith.constant 0 : i32
    %c0_i32_0 = arith.constant 0 : i32
    %c0_i32_1 = arith.constant 0 : i32
    return %c0_i32, %c0_i32_0 : i32, i32
  }
  func.func @transform_2(%arg0: i32) -> (i32, i32) {
    %c0_i32 = arith.constant 0 : i32
    %c0_i32_0 = arith.constant 0 : i32
    %c0_i32_1 = arith.constant 0 : i32
    return %c0_i32, %c0_i32_0 : i32, i32
  }
  func.func @transform_3(%arg0: i32) -> (i32, i32, i32) {
    %c0_i32 = arith.constant 0 : i32
    %c0_i32_0 = arith.constant 0 : i32
    %c0_i32_1 = arith.constant 0 : i32
    %c0_i32_2 = arith.constant 0 : i32
    return %c0_i32, %c0_i32_0, %c0_i32_1 : i32, i32, i32
  }
  func.func @transform_4(%arg0: i32) -> (i32, i32) {
    %c0_i32 = arith.constant 0 : i32
    %c0_i32_0 = arith.constant 0 : i32
    return %arg0, %c0_i32 : i32, i32
  }
  func.func @transform_5(%arg0: i32) -> (i32, i32) {
    %c0_i32 = arith.constant 0 : i32
    %c0_i32_0 = arith.constant 0 : i32
    return %arg0, %c0_i32 : i32, i32
  }
  func.func @transform_6(%arg0: i32) -> (i32, i32) {
    %c0_i32 = arith.constant 0 : i32
    %c0_i32_0 = arith.constant 0 : i32
    return %arg0, %c0_i32 : i32, i32
  }
}

module attributes {stable_mosaic.version = 11 : i64} {
  func.func @_epi_conv_sc_kernel(%arg0: i32, %arg1: memref<16x128xbf16, #tpu.memory_space<vmem>>, %arg2: memref<16x128xbf16, #tpu.memory_space<vmem>>, %arg3: memref<1x128xf32, #tpu.memory_space<vmem>>, %arg4: memref<1x128xf32, #tpu.memory_space<vmem>>, %arg5: memref<1x128xf32, #tpu.memory_space<vmem>>, %arg6: memref<1x128xf32, #tpu.memory_space<vmem>>, %arg7: memref<16x128xf32, #tpu.memory_space<vmem>>) attributes {dimension_semantics = [#tpu.dimension_semantics<parallel>], iteration_bounds = array<i64: 2>, scalar_prefetch = 0 : i64, scratch_operands = 0 : i64, tpu.core_type = #tpu.core_type<tc>, window_params = [{transform_indices = @transform_0, window_bounds = array<i64: 16, 128>}, {transform_indices = @transform_1, window_bounds = array<i64: 16, 128>}, {pipeline_mode = #tpu.pipeline_mode<synchronous>, transform_indices = @transform_2, window_bounds = array<i64: 1, 128>}, {pipeline_mode = #tpu.pipeline_mode<synchronous>, transform_indices = @transform_3, window_bounds = array<i64: 1, 128>}, {pipeline_mode = #tpu.pipeline_mode<synchronous>, transform_indices = @transform_4, window_bounds = array<i64: 1, 128>}, {pipeline_mode = #tpu.pipeline_mode<synchronous>, transform_indices = @transform_5, window_bounds = array<i64: 1, 128>}, {transform_indices = @transform_6, window_bounds = array<i64: 16, 128>}]} {
    %c0 = arith.constant 0 : index
    %c0_0 = arith.constant 0 : index
    %0 = vector.load %arg1[%c0, %c0_0] : memref<16x128xbf16, #tpu.memory_space<vmem>>, vector<16x128xbf16>
    %1 = arith.extf %0 : vector<16x128xbf16> to vector<16x128xf32>
    %c0_1 = arith.constant 0 : index
    %c0_2 = arith.constant 0 : index
    %2 = vector.load %arg3[%c0_1, %c0_2] : memref<1x128xf32, #tpu.memory_space<vmem>>, vector<1x128xf32>
    %3 = vector.broadcast %2 : vector<1x128xf32> to vector<16x128xf32>
    %4 = arith.mulf %1, %3 : vector<16x128xf32>
    %c0_3 = arith.constant 0 : index
    %c0_4 = arith.constant 0 : index
    %5 = vector.load %arg4[%c0_3, %c0_4] : memref<1x128xf32, #tpu.memory_space<vmem>>, vector<1x128xf32>
    %6 = vector.broadcast %5 : vector<1x128xf32> to vector<16x128xf32>
    %7 = arith.addf %4, %6 : vector<16x128xf32>
    %c0_5 = arith.constant 0 : index
    %c0_6 = arith.constant 0 : index
    %8 = vector.load %arg2[%c0_5, %c0_6] : memref<16x128xbf16, #tpu.memory_space<vmem>>, vector<16x128xbf16>
    %9 = arith.extf %8 : vector<16x128xbf16> to vector<16x128xf32>
    %c0_7 = arith.constant 0 : index
    %c0_8 = arith.constant 0 : index
    %10 = vector.load %arg5[%c0_7, %c0_8] : memref<1x128xf32, #tpu.memory_space<vmem>>, vector<1x128xf32>
    %11 = vector.broadcast %10 : vector<1x128xf32> to vector<16x128xf32>
    %12 = arith.mulf %9, %11 : vector<16x128xf32>
    %13 = arith.addf %7, %12 : vector<16x128xf32>
    %c0_9 = arith.constant 0 : index
    %c0_10 = arith.constant 0 : index
    %14 = vector.load %arg6[%c0_9, %c0_10] : memref<1x128xf32, #tpu.memory_space<vmem>>, vector<1x128xf32>
    %15 = vector.broadcast %14 : vector<1x128xf32> to vector<16x128xf32>
    %16 = arith.addf %13, %15 : vector<16x128xf32>
    %cst = arith.constant 0.000000e+00 : f32
    %17 = vector.broadcast %cst : f32 to vector<16x128xf32>
    %18 = arith.maximumf %16, %17 : vector<16x128xf32>
    %c0_11 = arith.constant 0 : index
    %c0_12 = arith.constant 0 : index
    %19 = vector.load %arg7[%c0_11, %c0_12] : memref<16x128xf32, #tpu.memory_space<vmem>>, vector<16x128xf32>
    tpu.vector_store %arg7[%c0_11, %c0_12], %18 {strides = array<i32>} : memref<16x128xf32, #tpu.memory_space<vmem>>, vector<16x128xf32>,
    return
  }
  func.func @transform_0(%arg0: i32) -> (i32, i32) {
    %c0_i32 = arith.constant 0 : i32
    %c0_i32_0 = arith.constant 0 : i32
    return %arg0, %c0_i32 : i32, i32
  }
  func.func @transform_1(%arg0: i32) -> (i32, i32) {
    %c1_i32 = arith.constant 1 : i32
    %c0_i32 = arith.constant 0 : i32
    return %arg0, %c1_i32 : i32, i32
  }
  func.func @transform_2(%arg0: i32) -> (i32, i32) {
    %c0_i32 = arith.constant 0 : i32
    %c0_i32_0 = arith.constant 0 : i32
    %c0_i32_1 = arith.constant 0 : i32
    return %c0_i32, %c0_i32_0 : i32, i32
  }
  func.func @transform_3(%arg0: i32) -> (i32, i32) {
    %c0_i32 = arith.constant 0 : i32
    %c0_i32_0 = arith.constant 0 : i32
    %c0_i32_1 = arith.constant 0 : i32
    return %c0_i32, %c0_i32_0 : i32, i32
  }
  func.func @transform_4(%arg0: i32) -> (i32, i32) {
    %c0_i32 = arith.constant 0 : i32
    %c0_i32_0 = arith.constant 0 : i32
    %c0_i32_1 = arith.constant 0 : i32
    return %c0_i32, %c0_i32_0 : i32, i32
  }
  func.func @transform_5(%arg0: i32) -> (i32, i32) {
    %c0_i32 = arith.constant 0 : i32
    %c0_i32_0 = arith.constant 0 : i32
    %c0_i32_1 = arith.constant 0 : i32
    return %c0_i32, %c0_i32_0 : i32, i32
  }
  func.func @transform_6(%arg0: i32) -> (i32, i32) {
    %c0_i32 = arith.constant 0 : i32
    %c0_i32_0 = arith.constant 0 : i32
    return %arg0, %c0_i32 : i32, i32
  }
}

</mosaic_0001>

<llo_original>
// kernel: resblock1_forward.5
$region0: #{resblock1_forward.5}
  #allocation0 [shape = 'u32[]', space=smem, size = 0x4, offset = 0x4, fixed_abs, tag = 'smem constant byte address 0x4 - core index']
  #allocation1 [shape = 'u32[72,128]{1,0:T(1,128)}', space=vmem, size = 0x9000, scoped, tag = 'internal scratch']
  %s0 = inlined_call_operand.vmem [shape: bf16[32,128], index: 0, kind: input, shape index: {}]
  %s1 = inlined_call_operand.vmem [shape: bf16[32,256], index: 1, kind: input, shape index: {}]
  %s2 = inlined_call_operand.vmem [shape: f32[1,128], index: 2, kind: input, shape index: {}]
  %s3 = inlined_call_operand.vmem [shape: f32[1,128], index: 3, kind: input, shape index: {}]
  %s4 = inlined_call_operand.vmem [shape: f32[1,128], index: 4, kind: input, shape index: {}]
  %s5 = inlined_call_operand.vmem [shape: f32[1,128], index: 5, kind: input, shape index: {}]
  %s6 = inlined_call_operand.vmem [shape: f32[32,128], index: 6, kind: output, shape index: {}]
  %s7 = sld [smem:[#allocation0]]
  $region98: #{resblock1_forward.5} parent=0
    _
  %s9 = ssub.s32 1, %s7
  %s10 = scalar_select 0, %s9, %s7
  $region1: #{resblock1_forward.5} parent=0
    #allocation2 [shape = 'u8[8192]{0}', space=vmem, size = 0x2000, scoped, tag = 'input window, operand 1']
    loop: start=0, step=1, limit=4
    $region2: #{resblock1_forward.5} parent=1 // loop_pre_header
      _
    $region3: #{resblock1_forward.5} parent=1 // loop_header
      %s12 = sphi 0, %s16
      %p13 = scmp.ge.s32.totalorder %s12, 4
      %s22 = sphi 0, %s24
      %s25 = sphi 0, %s22
      %s26 = sphi 0, %s25
      %s42 = sphi 0, %s26
      %s48 = sphi 0, %s50
      %s51 = sphi 0, %s48
      %s52 = sphi 0, %s51
      %s68 = sphi 0, %s52
      %s72 = sphi 0, %s72
      %s74 = sphi 0, %s72
      %s75 = sphi 0, %s74
      %s89 = sphi 0, %s75
      %s93 = sphi 0, %s93
      %s95 = sphi 0, %s93
      %s96 = sphi 0, %s95
      %s110 = sphi 0, %s96
      %s114 = sphi 0, %s114
      %s116 = sphi 0, %s114
      %s117 = sphi 0, %s116
      %s131 = sphi 0, %s117
      %s135 = sphi 0, %s135
      %s137 = sphi 0, %s135
      %s138 = sphi 0, %s137
      %s152 = sphi 0, %s138
      %s158 = sphi 0, %s160
      %s161 = sphi 0, %s158
      %s162 = sphi 0, %s161
      %s178 = sphi 0, %s162
    $region4: #{resblock1_forward.5} parent=1 // loop_header_branch
      %15 = sbr.rel (%p13) target = $region8
    $region5: #{resblock1_forward.5} parent=1 // loop_body
      %s17 = ssub.s32 %s12, 1
      %s18 = ssub.s32 %s12, 2
      %s19 = sadd.s32 %s12, 1
      %s20 = ssub.s32 %s12, %s19
      %p21 = scmp.eq.s32.totalorder %s20, 0
      %s23 = sadd.s32 %s22, 1
      %s24 = scalar_select %p21, %s22, %s23
      %p27 = pneg %p21
      %p28 = scmp.eq.s32.totalorder %s12, 1
      %p29 = por %p27, %p28
      %p30 = scmp.ne.s32.totalorder %s22, %s25
      %p31 = scmp.eq.s32.totalorder %s12, 0
      %p32 = por %p30, %p31
      %p33 = scmp.ne.s32.totalorder %s22, %s25
      %p34 = scmp.eq.s32.totalorder %s17, 1
      %p35 = por %p33, %p34
      %p36 = scmp.ne.s32.totalorder %s25, %s26
      %p37 = scmp.eq.s32.totalorder %s17, 0
      %p38 = por %p36, %p37
      %p39 = scmp.ne.s32.totalorder %s25, %s26
      %p40 = scmp.eq.s32.totalorder %s18, 1
      %p41 = por %p39, %p40
      %p43 = scmp.ne.s32.totalorder %s26, %s42
      %p44 = scmp.eq.s32.totalorder %s18, 0
      %p45 = por %p43, %p44
      %s46 = ssub.s32 %s12, %s19
      %p47 = scmp.eq.s32.totalorder %s46, 0
      %s49 = sadd.s32 %s48, 1
      %s50 = scalar_select %p47, %s48, %s49
      %p53 = pneg %p47
      %p54 = scmp.eq.s32.totalorder %s12, 1
      %p55 = por %p53, %p54
      %p56 = scmp.ne.s32.totalorder %s48, %s51
      %p57 = scmp.eq.s32.totalorder %s12, 0
      %p58 = por %p56, %p57
      %p59 = scmp.ne.s32.totalorder %s48, %s51
      %p60 = scmp.eq.s32.totalorder %s17, 1
      %p61 = por %p59, %p60
      %p62 = scmp.ne.s32.totalorder %s51, %s52
      %p63 = scmp.eq.s32.totalorder %s17, 0
      %p64 = por %p62, %p63
      %p65 = scmp.ne.s32.totalorder %s51, %s52
      %p66 = scmp.eq.s32.totalorder %s18, 1
      %p67 = por %p65, %p66
      %p69 = scmp.ne.s32.totalorder %s52, %s68
      %p70 = scmp.eq.s32.totalorder %s18, 0
      %p71 = por %p69, %p70
      %s73 = sadd.s32 %s72, 1
      %p76 = scmp.eq.s32.totalorder %s12, 1
      %p77 = scmp.ne.s32.totalorder %s72, %s74
      %p78 = scmp.eq.s32.totalorder %s12, 0
      %p79 = por %p77, %p78
      %p80 = scmp.ne.s32.totalorder %s72, %s74
      %p81 = scmp.eq.s32.totalorder %s17, 1
      %p82 = por %p80, %p81
      %p83 = scmp.ne.s32.totalorder %s74, %s75
      %p84 = scmp.eq.s32.totalorder %s17, 0
      %p85 = por %p83, %p84
      %p86 = scmp.ne.s32.totalorder %s74, %s75
      %p87 = scmp.eq.s32.totalorder %s18, 1
      %p88 = por %p86, %p87
      %p90 = scmp.ne.s32.totalorder %s75, %s89
      %p91 = scmp.eq.s32.totalorder %s18, 0
      %p92 = por %p90, %p91
      %s94 = sadd.s32 %s93, 1
      %p97 = scmp.eq.s32.totalorder %s12, 1
      %p98 = scmp.ne.s32.totalorder %s93, %s95
      %p99 = scmp.eq.s32.totalorder %s12, 0
      %p100 = por %p98, %p99
      %p101 = scmp.ne.s32.totalorder %s93, %s95
      %p102 = scmp.eq.s32.totalorder %s17, 1
      %p103 = por %p101, %p102
      %p104 = scmp.ne.s32.totalorder %s95, %s96
      %p105 = scmp.eq.s32.totalorder %s17, 0
      %p106 = por %p104, %p105
      %p107 = scmp.ne.s32.totalorder %s95, %s96
      %p108 = scmp.eq.s32.totalorder %s18, 1
      %p109 = por %p107, %p108
      %p111 = scmp.ne.s32.totalorder %s96, %s110
      %p112 = scmp.eq.s32.totalorder %s18, 0
      %p113 = por %p111, %p112
      %s115 = sadd.s32 %s114, 1
      %p118 = scmp.eq.s32.totalorder %s12, 1
      %p119 = scmp.ne.s32.totalorder %s114, %s116
      %p120 = scmp.eq.s32.totalorder %s12, 0
      %p121 = por %p119, %p120
      %p122 = scmp.ne.s32.totalorder %s114, %s116
      %p123 = scmp.eq.s32.totalorder %s17, 1
      %p124 = por %p122, %p123
      %p125 = scmp.ne.s32.totalorder %s116, %s117
      %p126 = scmp.eq.s32.totalorder %s17, 0
      %p127 = por %p125, %p126
      %p128 = scmp.ne.s32.totalorder %s116, %s117
      %p129 = scmp.eq.s32.totalorder %s18, 1
      %p130 = por %p128, %p129
      %p132 = scmp.ne.s32.totalorder %s117, %s131
      %p133 = scmp.eq.s32.totalorder %s18, 0
      %p134 = por %p132, %p133
      %s136 = sadd.s32 %s135, 1
      %p139 = scmp.eq.s32.totalorder %s12, 1
      %p140 = scmp.ne.s32.totalorder %s135, %s137
      %p141 = scmp.eq.s32.totalorder %s12, 0
      %p142 = por %p140, %p141
      %p143 = scmp.ne.s32.totalorder %s135, %s137
      %p144 = scmp.eq.s32.totalorder %s17, 1
      %p145 = por %p143, %p144
      %p146 = scmp.ne.s32.totalorder %s137, %s138
      %p147 = scmp.eq.s32.totalorder %s17, 0
      %p148 = por %p146, %p147
      %p149 = scmp.ne.s32.totalorder %s137, %s138
      %p150 = scmp.eq.s32.totalorder %s18, 1
      %p151 = por %p149, %p150
      %p153 = scmp.ne.s32.totalorder %s138, %s152
      %p154 = scmp.eq.s32.totalorder %s18, 0
      %p155 = por %p153, %p154
      %s156 = ssub.s32 %s12, %s19
      %p157 = scmp.eq.s32.totalorder %s156, 0
      %s159 = sadd.s32 %s158, 1
      %s160 = scalar_select %p157, %s158, %s159
      %p163 = pneg %p157
      %p164 = scmp.eq.s32.totalorder %s12, 1
      %p165 = por %p163, %p164
      %p166 = scmp.ne.s32.totalorder %s158, %s161
      %p167 = scmp.eq.s32.totalorder %s12, 0
      %p168 = por %p166, %p167
      %p169 = scmp.ne.s32.totalorder %s158, %s161
      %p170 = scmp.eq.s32.totalorder %s17, 1
      %p171 = por %p169, %p170
      %p172 = scmp.ne.s32.totalorder %s161, %s162
      %p173 = scmp.eq.s32.totalorder %s17, 0
      %p174 = por %p172, %p173
      %p175 = scmp.ne.s32.totalorder %s161, %s162
      %p176 = scmp.eq.s32.totalorder %s18, 1
      %p177 = por %p175, %p176
      %p179 = scmp.ne.s32.totalorder %s162, %s178
      %p180 = scmp.eq.s32.totalorder %s18, 0
      %p181 = por %p179, %p180
      %p182 = scmp.le.s32.totalorder 1, %s12
      %p183 = scmp.lt.s32.totalorder %s12, 3
      %p184 = pnand %p182, %p183
      %p185 = pneg %p184
      // Predicated region
      $region9: #{resblock1_forward.5} parent=5 // pred_check
        _
      $region10: #{resblock1_forward.5} parent=5 // pred_check_branch
        %187 = sbr.rel (%p184) target = $region12
      $region11: #{resblock1_forward.5} parent=5 // pred_region
        %s188 = ssub.s32 %s12, 1
        // Predicated region
        $region13: #{resblock1_forward.5} parent=11 // pred_check
          %p189 = pneg %p85
        $region14: #{resblock1_forward.5} parent=11 // pred_check_branch
          %191 = sbr.rel (%p189) target = $region16
        $region15: #{resblock1_forward.5} parent=11 // pred_region
          _
        $region16: #{resblock1_forward.5} parent=11 // pred_fallthru
          _
        // Predicated region
        $region17: #{resblock1_forward.5} parent=11 // pred_check
          %p192 = pneg %p106
        $region18: #{resblock1_forward.5} parent=11 // pred_check_branch
          %194 = sbr.rel (%p192) target = $region20
        $region19: #{resblock1_forward.5} parent=11 // pred_region
          _
        $region20: #{resblock1_forward.5} parent=11 // pred_fallthru
          _
        // Predicated region
        $region21: #{resblock1_forward.5} parent=11 // pred_check
          %p195 = pneg %p127
        $region22: #{resblock1_forward.5} parent=11 // pred_check_branch
          %197 = sbr.rel (%p195) target = $region24
        $region23: #{resblock1_forward.5} parent=11 // pred_region
          _
        $region24: #{resblock1_forward.5} parent=11 // pred_fallthru
          _
        // Predicated region
        $region25: #{resblock1_forward.5} parent=11 // pred_check
          %p198 = pneg %p148
        $region26: #{resblock1_forward.5} parent=11 // pred_check_branch
          %200 = sbr.rel (%p198) target = $region28
        $region27: #{resblock1_forward.5} parent=11 // pred_region
          _
        $region28: #{resblock1_forward.5} parent=11 // pred_fallthru
          _
      $region12: #{resblock1_forward.5} parent=5 // pred_fallthru
        _
      %p201 = scmp.lt.s32.totalorder %s12, 2
      // Predicated region
      $region29: #{resblock1_forward.5} parent=5 // pred_check
        %p202 = pneg %p201
      $region30: #{resblock1_forward.5} parent=5 // pred_check_branch
        %204 = sbr.rel (%p202) target = $region32
      $region31: #{resblock1_forward.5} parent=5 // pred_region
        // Predicated region
        $region33: #{resblock1_forward.5} parent=31 // pred_check
          %p205 = pneg %p32
        $region34: #{resblock1_forward.5} parent=31 // pred_check_branch
          %207 = sbr.rel (%p205) target = $region36
        $region35: #{resblock1_forward.5} parent=31 // pred_region
          %s208 = smul.u32 2, %s12
          %p209 = scmp.lt.s32.totalorder %s208, 3
          %s210 = scalar_select %p209, %s208, 3
          %s211 = smul.addr %s210, 4
          %s212 = scalar_lea.vmem %s0, %s211
          %s213 = smul.u32 2, %s12
        $region36: #{resblock1_forward.5} parent=31 // pred_fallthru
          _
        // Predicated region
        $region37: #{resblock1_forward.5} parent=31 // pred_check
          %p214 = pneg %p58
        $region38: #{resblock1_forward.5} parent=31 // pred_check_branch
          %216 = sbr.rel (%p214) target = $region40
        $region39: #{resblock1_forward.5} parent=31 // pred_region
          %s217 = sand.u32 %s48, 1
          %s218 = sand.u32 %s48, 1
          %s219 = smul.addr %s218, 8
          %s220 = scalar_lea.vmem [#allocation2], %s219
          %s221 = smul.u32 2, %s12
          %s222 = smul.addr %s221, 2
          %s223 = sadd.s32 1, %s222
          %s224 = smul.addr %s223, 4
          %s225 = scalar_lea.vmem %s1, %s224
          // Predicated region
          $region41: #{resblock1_forward.5} parent=39 // pred_check
            _
          $region42: #{resblock1_forward.5} parent=39 // pred_check_branch
            %227 = sbr.rel (0) target = $region44
          $region43: #{resblock1_forward.5} parent=39 // pred_region
            // Predicated region
            $region45: #{resblock1_forward.5} parent=43 // pred_check
              _
            $region46: #{resblock1_forward.5} parent=43 // pred_check_branch
              %229 = sbr.rel target = $region48
            $region47: #{resblock1_forward.5} parent=43 // pred_region
              // Predicated region
              $region60: #{resblock1_forward.5} parent=47 // pred_check
                _
              $region61: #{resblock1_forward.5} parent=47 // pred_check_branch
                %247 = sbr.rel (0) target = $region63
              $region62: #{resblock1_forward.5} parent=47 // pred_region
                loop: start=0, step=1, limit=1
                $region64: #{resblock1_forward.5} parent=62 // loop_pre_header
                  _
                $region65: #{resblock1_forward.5} parent=62 // loop_header
                  %s249 = sphi 0, %s253
                  %p250 = scmp.ge.s32.totalorder %s249, 1
                  %s254 = sphi %s225, %s225
                  %s255 = sphi %s220, %s220
                $region66: #{resblock1_forward.5} parent=62 // loop_header_branch
                  %252 = sbr.rel (%p250) target = $region70
                $region67: #{resblock1_forward.5} parent=62 // loop_body
                  _
                $region68: #{resblock1_forward.5} parent=62 // loop_footer
                  %s253 = sadd.s32 1, %s249
                $region69: #{resblock1_forward.5} parent=62 // loop_footer_branch
                  %248 = sbr.rel target = $region65
                $region70: #{resblock1_forward.5} parent=62 // loop_exit
                  _
                %s257 = ssub.s32 16, 1
                loop: start=0, step=1, limit=1
                $region71: #{resblock1_forward.5} parent=62 // loop_pre_header
                  _
                $region72: #{resblock1_forward.5} parent=62 // loop_header
                  %s259 = sphi 0, %s263
                  %p260 = scmp.ge.s32.totalorder %s259, 1
                  %s264 = sphi %s225, %s225
                  %s265 = sphi %s220, %s220
                $region73: #{resblock1_forward.5} parent=62 // loop_header_branch
                  %262 = sbr.rel (%p260) target = $region77
                $region74: #{resblock1_forward.5} parent=62 // loop_body
                  %v266 = vld [vmem:[%s264] sm:%s257]
                  %267 = vst [vmem:[%s265] sm:%s257] %v266
                  %v268 = vld [vmem:[%s264 + $0x8] sm:%s257]
                  %269 = vst [vmem:[%s265 + $0x4] sm:%s257] %v268
                $region75: #{resblock1_forward.5} parent=62 // loop_footer
                  %s263 = sadd.s32 1, %s259
                $region76: #{resblock1_forward.5} parent=62 // loop_footer_branch
                  %258 = sbr.rel target = $region72
                $region77: #{resblock1_forward.5} parent=62 // loop_exit
                  _
              $region63: #{resblock1_forward.5} parent=47 // pred_fallthru
                _
            $region48: #{resblock1_forward.5} parent=43 // pred_fallthru
              _
            // Predicated region
            $region49: #{resblock1_forward.5} parent=43 // pred_check
              _
            $region50: #{resblock1_forward.5} parent=43 // pred_check_branch
              %231 = sbr.rel (0) target = $region52
            $region51: #{resblock1_forward.5} parent=43 // pred_region
              %s233 = ssub.s32 16, 1
              loop: start=0, step=1, limit=1
              $region53: #{resblock1_forward.5} parent=51 // loop_pre_header
                _
              $region54: #{resblock1_forward.5} parent=51 // loop_header
                %s235 = sphi 0, %s239
                %p236 = scmp.ge.s32.totalorder %s235, 1
                %s240 = sphi %s225, %s225
                %s241 = sphi %s220, %s220
              $region55: #{resblock1_forward.5} parent=51 // loop_header_branch
                %238 = sbr.rel (%p236) target = $region59
              $region56: #{resblock1_forward.5} parent=51 // loop_body
                %v242 = vld [vmem:[%s240] sm:%s233]
                %243 = vst [vmem:[%s241] sm:%s233] %v242
                %v244 = vld [vmem:[%s240 + $0x8] sm:%s233]
                %245 = vst [vmem:[%s241 + $0x4] sm:%s233] %v244
              $region57: #{resblock1_forward.5} parent=51 // loop_footer
                %s239 = sadd.s32 1, %s235
              $region58: #{resblock1_forward.5} parent=51 // loop_footer_branch
                %234 = sbr.rel target = $region54
              $region59: #{resblock1_forward.5} parent=51 // loop_exit
                _
            $region52: #{resblock1_forward.5} parent=43 // pred_fallthru
              _
          $region44: #{resblock1_forward.5} parent=39 // pred_fallthru
            _
          %270 = vnop
        $region40: #{resblock1_forward.5} parent=31 // pred_fallthru
          _
      $region32: #{resblock1_forward.5} parent=5 // pred_fallthru
        _
      %p271 = scmp.le.s32.totalorder 1, %s12
      %p272 = scmp.lt.s32.totalorder %s12, 3
      %p273 = pnand %p271, %p272
      %p274 = pneg %p273
      // Predicated region
      $region78: #{resblock1_forward.5} parent=5 // pred_check
        _
      $region79: #{resblock1_forward.5} parent=5 // pred_check_branch
        %276 = sbr.rel (%p273) target = $region81
      $region80: #{resblock1_forward.5} parent=5 // pred_region
        %s277 = ssub.s32 %s12, 1
        %s278 = sand.u32 %s51, 1
        %s279 = sand.u32 %s51, 1
        %s280 = smul.addr %s279, 8
        %s281 = scalar_lea.vmem [#allocation2], %s280
        // Predicated region
        $region82: #{resblock1_forward.5} parent=80 // pred_check
          %p282 = pneg %p64
        $region83: #{resblock1_forward.5} parent=80 // pred_check_branch
          %284 = sbr.rel (%p282) target = $region85
        $region84: #{resblock1_forward.5} parent=80 // pred_region
          _
        $region85: #{resblock1_forward.5} parent=80 // pred_fallthru
          _
        %s285 = smul.u32 2, %s17
        %p286 = scmp.lt.s32.totalorder %s285, 3
        %s287 = scalar_select %p286, %s285, 3
        %s288 = smul.addr %s287, 4
        %s289 = scalar_lea.vmem %s0, %s288
        %p290 = pneg %p38
        %p291 = pneg %p35
        %s292 = sand.u32 %s51, 1
        %s293 = sand.u32 %s51, 1
        %s294 = smul.addr %s293, 8
        %s295 = scalar_lea.vmem [#allocation2], %s294
        %p296 = pneg %p64
        %p297 = pneg %p61
        %p298 = pneg %p85
        %p299 = pneg %p82
        %p300 = pneg %p106
        %p301 = pneg %p103
        %p302 = pneg %p127
        %p303 = pneg %p124
        %p304 = pneg %p148
        %p305 = pneg %p145
        %p306 = pneg %p174
        %p307 = pneg %p171
        %s308 = smul.u32 2, %s17
        %p309 = scmp.lt.s32.totalorder %s308, 3
        %s310 = scalar_select %p309, %s308, 3
        %s311 = smul.addr %s310, 8
        %s312 = scalar_lea.vmem %s6, %s311
        %s313 = smul.u32 2, %s17
        %p314 = scmp.lt.s32.totalorder %s313, 3
        %s315 = scalar_select %p314, %s313, 3
        %s316 = smul.addr %s315, 4
        %s317 = scalar_lea.vmem %s0, %s316
        %s318 = smul.u32 2, %s17
        %s319 = smul.u32 2, %s17
        %s320 = smul.u32 2, %s17
        %p321 = scmp.lt.s32.totalorder %s320, 3
        %s322 = scalar_select %p321, %s320, 3
        %s323 = smul.addr %s322, 8
        %s324 = scalar_lea.vmem %s6, %s323
        %s325 = smul.u32 2, %s17
        %v326 = vld [vmem:[%s317] sm:$0xf]
        %v327 = vld [vmem:[%s317 + $0x4] sm:$0xf]
        %v328 = vunpack.c.l.bf16 %v326
        %v329 = vunpack.c.l.bf16 %v327
        %v330 = vld [vmem:[%s2] sm:$0x1]
        %v332 = vperm.slane %v330, 0
        %v334 = vmul.f32 %v328, %v332
        %v335 = vmul.f32 %v329, %v332
        %v336 = vld [vmem:[%s3] sm:$0x1]
        %v338 = vperm.slane %v336, 0
        %v340 = vadd.f32 %v334, %v338
        %v341 = vadd.f32 %v335, %v338
        %v342 = vld [vmem:[%s281] sm:$0xf]
        %v343 = vld [vmem:[%s281 + $0x4] sm:$0xf]
        %v344 = vunpack.c.l.bf16 %v342
        %v345 = vunpack.c.l.bf16 %v343
        %v346 = vld [vmem:[%s4] sm:$0x1]
        %v348 = vperm.slane %v346, 0
        %v350 = vmul.f32 %v344, %v348
        %v351 = vmul.f32 %v345, %v348
        %v352 = vadd.f32 %v340, %v350
        %v353 = vadd.f32 %v341, %v351
        %v354 = vld [vmem:[%s5] sm:$0x1]
        %v356 = vperm.slane %v354, 0
        %v358 = vadd.f32 %v352, %v356
        %v359 = vadd.f32 %v353, %v356
        %v360 = vmax.f32 %v358, 0.0
        %v361 = vmax.f32 %v359, 0.0
        %362 = vst [vmem:[%s324] sm:$0xff] %v360
        %363 = vst [vmem:[%s324 + $0x8] sm:$0xff] %v361
        %s364 = smul.u32 2, %s17
        %p365 = scmp.lt.s32.totalorder %s364, 3
        %s366 = scalar_select %p365, %s364, 3
        %s367 = smul.addr %s366, 8
        %s368 = scalar_lea.vmem %s6, %s367
        // Predicated region
        $region86: #{resblock1_forward.5} parent=80 // pred_check
          %p369 = pneg %p171
        $region87: #{resblock1_forward.5} parent=80 // pred_check_branch
          %371 = sbr.rel (%p369) target = $region89
        $region88: #{resblock1_forward.5} parent=80 // pred_region
          %s372 = smul.u32 2, %s17
        $region89: #{resblock1_forward.5} parent=80 // pred_fallthru
          _
      $region81: #{resblock1_forward.5} parent=5 // pred_fallthru
        _
      %p373 = scmp.le.s32.totalorder 2, %s12
      // Predicated region
      $region90: #{resblock1_forward.5} parent=5 // pred_check
        %p374 = pneg %p373
      $region91: #{resblock1_forward.5} parent=5 // pred_check_branch
        %376 = sbr.rel (%p374) target = $region93
      $region92: #{resblock1_forward.5} parent=5 // pred_region
        %s377 = ssub.s32 %s12, 2
        // Predicated region
        $region94: #{resblock1_forward.5} parent=92 // pred_check
          %p378 = pneg %p177
        $region95: #{resblock1_forward.5} parent=92 // pred_check_branch
          %380 = sbr.rel (%p378) target = $region97
        $region96: #{resblock1_forward.5} parent=92 // pred_region
          %s381 = smul.u32 2, %s18
          %p382 = scmp.lt.s32.totalorder %s381, 3
          %s383 = scalar_select %p382, %s381, 3
          %s384 = smul.addr %s383, 8
          %s385 = scalar_lea.vmem %s6, %s384
        $region97: #{resblock1_forward.5} parent=92 // pred_fallthru
          _
      $region93: #{resblock1_forward.5} parent=5 // pred_fallthru
        _
    $region6: #{resblock1_forward.5} parent=1 // loop_footer
      %s16 = sadd.s32 1, %s12
    $region7: #{resblock1_forward.5} parent=1 // loop_footer_branch
      %11 = sbr.rel target = $region3
    $region8: #{resblock1_forward.5} parent=1 // loop_exit
      _

// kernel: resblock1_forward.3
$region0: #{resblock1_forward.3}
  #allocation0 [shape = 'u32[]', space=smem, size = 0x4, offset = 0x4, fixed_abs, tag = 'smem constant byte address 0x4 - core index']
  #allocation1 [shape = 'u32[72,128]{1,0:T(1,128)}', space=vmem, size = 0x9000, scoped, tag = 'internal scratch']
  %s0 = inlined_call_operand.vmem [shape: f32[48,128], index: 0, kind: input, shape index: {}]
  %s1 = inlined_call_operand.vmem [shape: bf16[3,128,256], index: 1, kind: input, shape index: {}]
  %s2 = inlined_call_operand.vmem [shape: bf16[32,256], index: 2, kind: output, shape index: {0}]
  %s3 = inlined_call_operand.vmem [shape: f32[16,256], index: 3, kind: output, shape index: {1}]
  %s4 = inlined_call_operand.vmem [shape: f32[16,256], index: 4, kind: output, shape index: {2}]
  %5 = xla_tuple %s2, %s3, %s4
  %s6 = sld [smem:[#allocation0]]
  $region57: #{resblock1_forward.3} parent=0
    _
  %s8 = ssub.s32 1, %s6
  %s9 = scalar_select 0, %s8, %s6
  loop: start=0, step=1, limit=4
  $region2: #{resblock1_forward.3} parent=0 // loop_pre_header
    _
  $region3: #{resblock1_forward.3} parent=0 // loop_header
    %s11 = sphi 0, %s15
    %p12 = scmp.ge.s32.totalorder %s11, 4
    %s21 = sphi 0, %s23
    %s24 = sphi 0, %s21
    %s25 = sphi 0, %s24
    %s41 = sphi 0, %s25
    %s45 = sphi 0, %s45
    %s47 = sphi 0, %s45
    %s48 = sphi 0, %s47
    %s62 = sphi 0, %s48
    %s68 = sphi 0, %s70
    %s71 = sphi 0, %s68
    %s72 = sphi 0, %s71
    %s88 = sphi 0, %s72
    %s94 = sphi 0, %s96
    %s97 = sphi 0, %s94
    %s98 = sphi 0, %s97
    %s114 = sphi 0, %s98
    %s120 = sphi 0, %s122
    %s123 = sphi 0, %s120
    %s124 = sphi 0, %s123
    %s140 = sphi 0, %s124
  $region4: #{resblock1_forward.3} parent=0 // loop_header_branch
    %14 = sbr.rel (%p12) target = $region8
  $region5: #{resblock1_forward.3} parent=0 // loop_body
    %s16 = ssub.s32 %s11, 1
    %s17 = ssub.s32 %s11, 2
    %s18 = sadd.s32 %s11, 1
    %s19 = ssub.s32 %s11, %s18
    %p20 = scmp.eq.s32.totalorder %s19, 0
    %s22 = sadd.s32 %s21, 1
    %s23 = scalar_select %p20, %s21, %s22
    %p26 = pneg %p20
    %p27 = scmp.eq.s32.totalorder %s11, 1
    %p28 = por %p26, %p27
    %p29 = scmp.ne.s32.totalorder %s21, %s24
    %p30 = scmp.eq.s32.totalorder %s11, 0
    %p31 = por %p29, %p30
    %p32 = scmp.ne.s32.totalorder %s21, %s24
    %p33 = scmp.eq.s32.totalorder %s16, 1
    %p34 = por %p32, %p33
    %p35 = scmp.ne.s32.totalorder %s24, %s25
    %p36 = scmp.eq.s32.totalorder %s16, 0
    %p37 = por %p35, %p36
    %p38 = scmp.ne.s32.totalorder %s24, %s25
    %p39 = scmp.eq.s32.totalorder %s17, 1
    %p40 = por %p38, %p39
    %p42 = scmp.ne.s32.totalorder %s25, %s41
    %p43 = scmp.eq.s32.totalorder %s17, 0
    %p44 = por %p42, %p43
    %s46 = sadd.s32 %s45, 1
    %p49 = scmp.eq.s32.totalorder %s11, 1
    %p50 = scmp.ne.s32.totalorder %s45, %s47
    %p51 = scmp.eq.s32.totalorder %s11, 0
    %p52 = por %p50, %p51
    %p53 = scmp.ne.s32.totalorder %s45, %s47
    %p54 = scmp.eq.s32.totalorder %s16, 1
    %p55 = por %p53, %p54
    %p56 = scmp.ne.s32.totalorder %s47, %s48
    %p57 = scmp.eq.s32.totalorder %s16, 0
    %p58 = por %p56, %p57
    %p59 = scmp.ne.s32.totalorder %s47, %s48
    %p60 = scmp.eq.s32.totalorder %s17, 1
    %p61 = por %p59, %p60
    %p63 = scmp.ne.s32.totalorder %s48, %s62
    %p64 = scmp.eq.s32.totalorder %s17, 0
    %p65 = por %p63, %p64
    %s66 = ssub.s32 %s11, %s18
    %p67 = scmp.eq.s32.totalorder %s66, 0
    %s69 = sadd.s32 %s68, 1
    %s70 = scalar_select %p67, %s68, %s69
    %p73 = pneg %p67
    %p74 = scmp.eq.s32.totalorder %s11, 1
    %p75 = por %p73, %p74
    %p76 = scmp.ne.s32.totalorder %s68, %s71
    %p77 = scmp.eq.s32.totalorder %s11, 0
    %p78 = por %p76, %p77
    %p79 = scmp.ne.s32.totalorder %s68, %s71
    %p80 = scmp.eq.s32.totalorder %s16, 1
    %p81 = por %p79, %p80
    %p82 = scmp.ne.s32.totalorder %s71, %s72
    %p83 = scmp.eq.s32.totalorder %s16, 0
    %p84 = por %p82, %p83
    %p85 = scmp.ne.s32.totalorder %s71, %s72
    %p86 = scmp.eq.s32.totalorder %s17, 1
    %p87 = por %p85, %p86
    %p89 = scmp.ne.s32.totalorder %s72, %s88
    %p90 = scmp.eq.s32.totalorder %s17, 0
    %p91 = por %p89, %p90
    %s92 = ssub.s32 %s11, %s18
    %p93 = scmp.eq.s32.totalorder %s92, 0
    %s95 = sadd.s32 %s94, 1
    %s96 = scalar_select %p93, %s94, %s95
    %p99 = pneg %p93
    %p100 = scmp.eq.s32.totalorder %s11, 1
    %p101 = por %p99, %p100
    %p102 = scmp.ne.s32.totalorder %s94, %s97
    %p103 = scmp.eq.s32.totalorder %s11, 0
    %p104 = por %p102, %p103
    %p105 = scmp.ne.s32.totalorder %s94, %s97
    %p106 = scmp.eq.s32.totalorder %s16, 1
    %p107 = por %p105, %p106
    %p108 = scmp.ne.s32.totalorder %s97, %s98
    %p109 = scmp.eq.s32.totalorder %s16, 0
    %p110 = por %p108, %p109
    %p111 = scmp.ne.s32.totalorder %s97, %s98
    %p112 = scmp.eq.s32.totalorder %s17, 1
    %p113 = por %p111, %p112
    %p115 = scmp.ne.s32.totalorder %s98, %s114
    %p116 = scmp.eq.s32.totalorder %s17, 0
    %p117 = por %p115, %p116
    %s118 = ssub.s32 %s11, %s18
    %p119 = scmp.eq.s32.totalorder %s118, 0
    %s121 = sadd.s32 %s120, 1
    %s122 = scalar_select %p119, %s120, %s121
    %p125 = pneg %p119
    %p126 = scmp.eq.s32.totalorder %s11, 1
    %p127 = por %p125, %p126
    %p128 = scmp.ne.s32.totalorder %s120, %s123
    %p129 = scmp.eq.s32.totalorder %s11, 0
    %p130 = por %p128, %p129
    %p131 = scmp.ne.s32.totalorder %s120, %s123
    %p132 = scmp.eq.s32.totalorder %s16, 1
    %p133 = por %p131, %p132
    %p134 = scmp.ne.s32.totalorder %s123, %s124
    %p135 = scmp.eq.s32.totalorder %s16, 0
    %p136 = por %p134, %p135
    %p137 = scmp.ne.s32.totalorder %s123, %s124
    %p138 = scmp.eq.s32.totalorder %s17, 1
    %p139 = por %p137, %p138
    %p141 = scmp.ne.s32.totalorder %s124, %s140
    %p142 = scmp.eq.s32.totalorder %s17, 0
    %p143 = por %p141, %p142
    %p144 = scmp.le.s32.totalorder 1, %s11
    %p145 = scmp.lt.s32.totalorder %s11, 3
    %p146 = pnand %p144, %p145
    %p147 = pneg %p146
    // Predicated region
    $region9: #{resblock1_forward.3} parent=5 // pred_check
      _
    $region10: #{resblock1_forward.3} parent=5 // pred_check_branch
      %149 = sbr.rel (%p146) target = $region12
    $region11: #{resblock1_forward.3} parent=5 // pred_region
      %s150 = ssub.s32 %s11, 1
      // Predicated region
      $region13: #{resblock1_forward.3} parent=11 // pred_check
        %p151 = pneg %p58
      $region14: #{resblock1_forward.3} parent=11 // pred_check_branch
        %153 = sbr.rel (%p151) target = $region16
      $region15: #{resblock1_forward.3} parent=11 // pred_region
        _
      $region16: #{resblock1_forward.3} parent=11 // pred_fallthru
        _
    $region12: #{resblock1_forward.3} parent=5 // pred_fallthru
      _
    %p154 = scmp.lt.s32.totalorder %s11, 2
    // Predicated region
    $region17: #{resblock1_forward.3} parent=5 // pred_check
      %p155 = pneg %p154
    $region18: #{resblock1_forward.3} parent=5 // pred_check_branch
      %157 = sbr.rel (%p155) target = $region20
    $region19: #{resblock1_forward.3} parent=5 // pred_region
      // Predicated region
      $region21: #{resblock1_forward.3} parent=19 // pred_check
        %p158 = pneg %p31
      $region22: #{resblock1_forward.3} parent=19 // pred_check_branch
        %160 = sbr.rel (%p158) target = $region24
      $region23: #{resblock1_forward.3} parent=19 // pred_region
        %s161 = smul.u32 3, %s11
        %p162 = scmp.lt.s32.totalorder %s161, 5
        %s163 = scalar_select %p162, %s161, 5
        %s164 = smul.addr %s163, 8
        %s165 = scalar_lea.vmem %s0, %s164
        %s166 = smul.u32 3, %s11
      $region24: #{resblock1_forward.3} parent=19 // pred_fallthru
        _
    $region20: #{resblock1_forward.3} parent=5 // pred_fallthru
      _
    %p167 = scmp.le.s32.totalorder 1, %s11
    %p168 = scmp.lt.s32.totalorder %s11, 3
    %p169 = pnand %p167, %p168
    %p170 = pneg %p169
    // Predicated region
    $region25: #{resblock1_forward.3} parent=5 // pred_check
      _
    $region26: #{resblock1_forward.3} parent=5 // pred_check_branch
      %172 = sbr.rel (%p169) target = $region28
    $region27: #{resblock1_forward.3} parent=5 // pred_region
      %s173 = ssub.s32 %s11, 1
      %s174 = smul.u32 3, %s16
      %p175 = scmp.lt.s32.totalorder %s174, 5
      %s176 = scalar_select %p175, %s174, 5
      %s177 = smul.addr %s176, 8
      %s178 = scalar_lea.vmem %s0, %s177
      %p179 = pneg %p37
      %p180 = pneg %p34
      %p181 = pneg %p58
      %p182 = pneg %p55
      %p183 = pneg %p84
      %p184 = pneg %p81
      %s185 = smul.u32 2, %s16
      %p186 = scmp.lt.s32.totalorder %s185, 3
      %s187 = scalar_select %p186, %s185, 3
      %s188 = smul.addr %s187, 2
      %s189 = smul.addr %s188, 4
      %s190 = scalar_lea.vmem %s2, %s189
      %p191 = pneg %p110
      %p192 = pneg %p107
      %p193 = scmp.lt.s32.totalorder %s16, 1
      %s194 = scalar_select %p193, %s16, 1
      %s195 = smul.addr %s194, 2
      %s196 = smul.addr %s195, 8
      %s197 = scalar_lea.vmem %s3, %s196
      %p198 = pneg %p136
      %p199 = pneg %p133
      %p200 = scmp.lt.s32.totalorder %s16, 1
      %s201 = scalar_select %p200, %s16, 1
      %s202 = smul.addr %s201, 2
      %s203 = smul.addr %s202, 8
      %s204 = scalar_lea.vmem %s4, %s203
      %s205 = smul.u32 3, %s16
      %p206 = scmp.lt.s32.totalorder %s205, 5
      %s207 = scalar_select %p206, %s205, 5
      %s208 = smul.addr %s207, 8
      %s209 = scalar_lea.vmem %s0, %s208
      %s210 = smul.u32 3, %s16
      %s211 = smul.u32 2, %s16
      %p212 = scmp.lt.s32.totalorder %s211, 3
      %s213 = scalar_select %p212, %s211, 3
      %s214 = smul.addr %s213, 2
      %s215 = smul.addr %s214, 4
      %s216 = scalar_lea.vmem %s2, %s215
      %s217 = smul.u32 2, %s16
      %p218 = scmp.lt.s32.totalorder %s16, 1
      %s219 = scalar_select %p218, %s16, 1
      %s220 = smul.addr %s219, 2
      %s221 = smul.addr %s220, 8
      %s222 = scalar_lea.vmem %s3, %s221
      %p223 = scmp.lt.s32.totalorder %s16, 1
      %s224 = scalar_select %p223, %s16, 1
      %s225 = smul.addr %s224, 2
      %s226 = smul.addr %s225, 8
      %s227 = scalar_lea.vmem %s4, %s226
      %v228 = vld [vmem:[%s209] sm:$0xff]
      %v229 = vld [vmem:[%s209 + $0x8] sm:$0xff]
      %v230 = vpack.c.bf16 %v229, %v228
      %v231 = vld [vmem:[%s1] sm:$0xff]
      %v232 = vld [vmem:[%s1 + $0x8] sm:$0xff]
      %v233 = vld [vmem:[%s1 + $0x10] sm:$0xff]
      %v234 = vld [vmem:[%s1 + $0x18] sm:$0xff]
      %v235 = vld [vmem:[%s1 + $0x20] sm:$0xff]
      %v236 = vld [vmem:[%s1 + $0x28] sm:$0xff]
      %v237 = vld [vmem:[%s1 + $0x30] sm:$0xff]
      %v238 = vld [vmem:[%s1 + $0x38] sm:$0xff]
      %v239 = vld [vmem:[%s1 + $0x40] sm:$0xff]
      %v240 = vld [vmem:[%s1 + $0x48] sm:$0xff]
      %v241 = vld [vmem:[%s1 + $0x50] sm:$0xff]
      %v242 = vld [vmem:[%s1 + $0x58] sm:$0xff]
      %v243 = vld [vmem:[%s1 + $0x60] sm:$0xff]
      %v244 = vld [vmem:[%s1 + $0x68] sm:$0xff]
      %v245 = vld [vmem:[%s1 + $0x70] sm:$0xff]
      %v246 = vld [vmem:[%s1 + $0x78] sm:$0xff]
      %v247 = vld [vmem:[%s209 + $0x1] sm:$0xff]
      %v248 = vld [vmem:[%s209 + $0x9] sm:$0xff]
      %v249 = vpack.c.bf16 %v248, %v247
      %s250 = scalar_lea.vmem %s1, 128
      %v251 = vld [vmem:[%s250] sm:$0xff]
      %v252 = vld [vmem:[%s250 + $0x8] sm:$0xff]
      %v253 = vld [vmem:[%s250 + $0x10] sm:$0xff]
      %v254 = vld [vmem:[%s250 + $0x18] sm:$0xff]
      %v255 = vld [vmem:[%s250 + $0x20] sm:$0xff]
      %v256 = vld [vmem:[%s250 + $0x28] sm:$0xff]
      %v257 = vld [vmem:[%s250 + $0x30] sm:$0xff]
      %v258 = vld [vmem:[%s250 + $0x38] sm:$0xff]
      %v259 = vld [vmem:[%s250 + $0x40] sm:$0xff]
      %v260 = vld [vmem:[%s250 + $0x48] sm:$0xff]
      %v261 = vld [vmem:[%s250 + $0x50] sm:$0xff]
      %v262 = vld [vmem:[%s250 + $0x58] sm:$0xff]
      %v263 = vld [vmem:[%s250 + $0x60] sm:$0xff]
      %v264 = vld [vmem:[%s250 + $0x68] sm:$0xff]
      %v265 = vld [vmem:[%s250 + $0x70] sm:$0xff]
      %v266 = vld [vmem:[%s250 + $0x78] sm:$0xff]
      %v283 = vunpack.c.l.b16 %v251
      %v284 = vunpack.c.h.b16 %v251
      %v285 = vunpack.c.l.b16 %v252
      %v286 = vunpack.c.h.b16 %v252
      %v287 = vunpack.c.l.b16 %v253
      %v288 = vunpack.c.h.b16 %v253
      %v289 = vunpack.c.l.b16 %v254
      %v290 = vunpack.c.h.b16 %v254
      %v291 = vunpack.c.l.b16 %v255
      %v292 = vunpack.c.h.b16 %v255
      %v293 = vunpack.c.l.b16 %v256
      %v294 = vunpack.c.h.b16 %v256
      %v295 = vunpack.c.l.b16 %v257
      %v296 = vunpack.c.h.b16 %v257
      %v297 = vunpack.c.l.b16 %v258
      %v298 = vunpack.c.h.b16 %v258
      %v299 = vunpack.c.l.b16 %v259
      %v300 = vunpack.c.h.b16 %v259
      %v301 = vunpack.c.l.b16 %v260
      %v302 = vunpack.c.h.b16 %v260
      %v303 = vunpack.c.l.b16 %v261
      %v304 = vunpack.c.h.b16 %v261
      %v305 = vunpack.c.l.b16 %v262
      %v306 = vunpack.c.h.b16 %v262
      %v307 = vunpack.c.l.b16 %v263
      %v308 = vunpack.c.h.b16 %v263
      %v309 = vunpack.c.l.b16 %v264
      %v310 = vunpack.c.h.b16 %v264
      %v311 = vunpack.c.l.b16 %v265
      %v312 = vunpack.c.h.b16 %v265
      %v313 = vunpack.c.l.b16 %v266
      %v314 = vunpack.c.h.b16 %v266
      %v315 = vpack.c.b16 %v285, %v283
      %v316 = vpack.c.b16 %v286, %v284
      %v317 = vpack.c.b16 %v289, %v287
      %v318 = vpack.c.b16 %v290, %v288
      %v319 = vpack.c.b16 %v293, %v291
      %v320 = vpack.c.b16 %v294, %v292
      %v321 = vpack.c.b16 %v297, %v295
      %v322 = vpack.c.b16 %v298, %v296
      %v323 = vpack.c.b16 %v301, %v299
      %v324 = vpack.c.b16 %v302, %v300
      %v325 = vpack.c.b16 %v305, %v303
      %v326 = vpack.c.b16 %v306, %v304
      %v327 = vpack.c.b16 %v309, %v307
      %v328 = vpack.c.b16 %v310, %v308
      %v329 = vpack.c.b16 %v313, %v311
      %v330 = vpack.c.b16 %v314, %v312
      %347 = vmatpush.bf16.msra.mxu0 %v329
      %348 = vmatpush.bf16.msra.mxu0 %v327
      %349 = vmatpush.bf16.msra.mxu0 %v325
      %350 = vmatpush.bf16.msra.mxu0 %v323
      %351 = vmatpush.bf16.msra.mxu0 %v321
      %352 = vmatpush.bf16.msra.mxu0 %v319
      %353 = vmatpush.bf16.msra.mxu0 %v317
      %354 = vmatpush.bf16.msra.mxu0 %v315
      %355 = vmatmul.bf16.gmra.mxu0 %v249
      %v356 = vpop.f32.mrf.mxu0
      %v357 = vadd.f32 0.0, %v356
      %v358 = vpop.f32.mrf.mxu0
      %v359 = vadd.f32 0.0, %v358
      %360 = vdwg.mxu0
      %361 = vmatpush.bf16.msra.mxu0 %v330
      %362 = vmatpush.bf16.msra.mxu0 %v328
      %363 = vmatpush.bf16.msra.mxu0 %v326
      %364 = vmatpush.bf16.msra.mxu0 %v324
      %365 = vmatpush.bf16.msra.mxu0 %v322
      %366 = vmatpush.bf16.msra.mxu0 %v320
      %367 = vmatpush.bf16.msra.mxu0 %v318
      %368 = vmatpush.bf16.msra.mxu0 %v316
      %369 = vmatmul.bf16.gmra.mxu0 %v249
      %v370 = vpop.f32.mrf.mxu0
      %v371 = vadd.f32 0.0, %v370
      %v372 = vpop.f32.mrf.mxu0
      %v373 = vadd.f32 0.0, %v372
      %374 = vdwg.mxu0
      %v391 = vunpack.c.l.b16 %v231
      %v392 = vunpack.c.h.b16 %v231
      %v393 = vunpack.c.l.b16 %v232
      %v394 = vunpack.c.h.b16 %v232
      %v395 = vunpack.c.l.b16 %v233
      %v396 = vunpack.c.h.b16 %v233
      %v397 = vunpack.c.l.b16 %v234
      %v398 = vunpack.c.h.b16 %v234
      %v399 = vunpack.c.l.b16 %v235
      %v400 = vunpack.c.h.b16 %v235
      %v401 = vunpack.c.l.b16 %v236
      %v402 = vunpack.c.h.b16 %v236
      %v403 = vunpack.c.l.b16 %v237
      %v404 = vunpack.c.h.b16 %v237
      %v405 = vunpack.c.l.b16 %v238
      %v406 = vunpack.c.h.b16 %v238
      %v407 = vunpack.c.l.b16 %v239
      %v408 = vunpack.c.h.b16 %v239
      %v409 = vunpack.c.l.b16 %v240
      %v410 = vunpack.c.h.b16 %v240
      %v411 = vunpack.c.l.b16 %v241
      %v412 = vunpack.c.h.b16 %v241
      %v413 = vunpack.c.l.b16 %v242
      %v414 = vunpack.c.h.b16 %v242
      %v415 = vunpack.c.l.b16 %v243
      %v416 = vunpack.c.h.b16 %v243
      %v417 = vunpack.c.l.b16 %v244
      %v418 = vunpack.c.h.b16 %v244
      %v419 = vunpack.c.l.b16 %v245
      %v420 = vunpack.c.h.b16 %v245
      %v421 = vunpack.c.l.b16 %v246
      %v422 = vunpack.c.h.b16 %v246
      %v423 = vpack.c.b16 %v393, %v391
      %v424 = vpack.c.b16 %v394, %v392
      %v425 = vpack.c.b16 %v397, %v395
      %v426 = vpack.c.b16 %v398, %v396
      %v427 = vpack.c.b16 %v401, %v399
      %v428 = vpack.c.b16 %v402, %v400
      %v429 = vpack.c.b16 %v405, %v403
      %v430 = vpack.c.b16 %v406, %v404
      %v431 = vpack.c.b16 %v409, %v407
      %v432 = vpack.c.b16 %v410, %v408
      %v433 = vpack.c.b16 %v413, %v411
      %v434 = vpack.c.b16 %v414, %v412
      %v435 = vpack.c.b16 %v417, %v415
      %v436 = vpack.c.b16 %v418, %v416
      %v437 = vpack.c.b16 %v421, %v419
      %v438 = vpack.c.b16 %v422, %v420
      %455 = vmatpush.bf16.msra.mxu0 %v437
      %456 = vmatpush.bf16.msra.mxu0 %v435
      %457 = vmatpush.bf16.msra.mxu0 %v433
      %458 = vmatpush.bf16.msra.mxu0 %v431
      %459 = vmatpush.bf16.msra.mxu0 %v429
      %460 = vmatpush.bf16.msra.mxu0 %v427
      %461 = vmatpush.bf16.msra.mxu0 %v425
      %462 = vmatpush.bf16.msra.mxu0 %v423
      %463 = vmatmul.bf16.gmra.mxu0 %v230
      %v464 = vpop.f32.mrf.mxu0
      %v465 = vadd.f32 %v357, %v464
      %v466 = vpop.f32.mrf.mxu0
      %v467 = vadd.f32 %v359, %v466
      %468 = vdwg.mxu0
      %469 = vmatpush.bf16.msra.mxu0 %v438
      %470 = vmatpush.bf16.msra.mxu0 %v436
      %471 = vmatpush.bf16.msra.mxu0 %v434
      %472 = vmatpush.bf16.msra.mxu0 %v432
      %473 = vmatpush.bf16.msra.mxu0 %v430
      %474 = vmatpush.bf16.msra.mxu0 %v428
      %475 = vmatpush.bf16.msra.mxu0 %v426
      %476 = vmatpush.bf16.msra.mxu0 %v424
      %477 = vmatmul.bf16.gmra.mxu0 %v230
      %v478 = vpop.f32.mrf.mxu0
      %v479 = vadd.f32 %v371, %v478
      %v480 = vpop.f32.mrf.mxu0
      %v481 = vadd.f32 %v373, %v480
      %482 = vdwg.mxu0
      %v483 = vld [vmem:[%s209 + $0x2] sm:$0xff]
      %v484 = vld [vmem:[%s209 + $0xa] sm:$0xff]
      %v485 = vpack.c.bf16 %v484, %v483
      %s486 = scalar_lea.vmem %s1, 256
      %v487 = vld [vmem:[%s486] sm:$0xff]
      %v488 = vld [vmem:[%s486 + $0x8] sm:$0xff]
      %v489 = vld [vmem:[%s486 + $0x10] sm:$0xff]
      %v490 = vld [vmem:[%s486 + $0x18] sm:$0xff]
      %v491 = vld [vmem:[%s486 + $0x20] sm:$0xff]
      %v492 = vld [vmem:[%s486 + $0x28] sm:$0xff]
      %v493 = vld [vmem:[%s486 + $0x30] sm:$0xff]
      %v494 = vld [vmem:[%s486 + $0x38] sm:$0xff]
      %v495 = vld [vmem:[%s486 + $0x40] sm:$0xff]
      %v496 = vld [vmem:[%s486 + $0x48] sm:$0xff]
      %v497 = vld [vmem:[%s486 + $0x50] sm:$0xff]
      %v498 = vld [vmem:[%s486 + $0x58] sm:$0xff]
      %v499 = vld [vmem:[%s486 + $0x60] sm:$0xff]
      %v500 = vld [vmem:[%s486 + $0x68] sm:$0xff]
      %v501 = vld [vmem:[%s486 + $0x70] sm:$0xff]
      %v502 = vld [vmem:[%s486 + $0x78] sm:$0xff]
      %v519 = vunpack.c.l.b16 %v487
      %v520 = vunpack.c.h.b16 %v487
      %v521 = vunpack.c.l.b16 %v488
      %v522 = vunpack.c.h.b16 %v488
      %v523 = vunpack.c.l.b16 %v489
      %v524 = vunpack.c.h.b16 %v489
      %v525 = vunpack.c.l.b16 %v490
      %v526 = vunpack.c.h.b16 %v490
      %v527 = vunpack.c.l.b16 %v491
      %v528 = vunpack.c.h.b16 %v491
      %v529 = vunpack.c.l.b16 %v492
      %v530 = vunpack.c.h.b16 %v492
      %v531 = vunpack.c.l.b16 %v493
      %v532 = vunpack.c.h.b16 %v493
      %v533 = vunpack.c.l.b16 %v494
      %v534 = vunpack.c.h.b16 %v494
      %v535 = vunpack.c.l.b16 %v495
      %v536 = vunpack.c.h.b16 %v495
      %v537 = vunpack.c.l.b16 %v496
      %v538 = vunpack.c.h.b16 %v496
      %v539 = vunpack.c.l.b16 %v497
      %v540 = vunpack.c.h.b16 %v497
      %v541 = vunpack.c.l.b16 %v498
      %v542 = vunpack.c.h.b16 %v498
      %v543 = vunpack.c.l.b16 %v499
      %v544 = vunpack.c.h.b16 %v499
      %v545 = vunpack.c.l.b16 %v500
      %v546 = vunpack.c.h.b16 %v500
      %v547 = vunpack.c.l.b16 %v501
      %v548 = vunpack.c.h.b16 %v501
      %v549 = vunpack.c.l.b16 %v502
      %v550 = vunpack.c.h.b16 %v502
      %v551 = vpack.c.b16 %v521, %v519
      %v552 = vpack.c.b16 %v522, %v520
      %v553 = vpack.c.b16 %v525, %v523
      %v554 = vpack.c.b16 %v526, %v524
      %v555 = vpack.c.b16 %v529, %v527
      %v556 = vpack.c.b16 %v530, %v528
      %v557 = vpack.c.b16 %v533, %v531
      %v558 = vpack.c.b16 %v534, %v532
      %v559 = vpack.c.b16 %v537, %v535
      %v560 = vpack.c.b16 %v538, %v536
      %v561 = vpack.c.b16 %v541, %v539
      %v562 = vpack.c.b16 %v542, %v540
      %v563 = vpack.c.b16 %v545, %v543
      %v564 = vpack.c.b16 %v546, %v544
      %v565 = vpack.c.b16 %v549, %v547
      %v566 = vpack.c.b16 %v550, %v548
      %583 = vmatpush.bf16.msra.mxu0 %v565
      %584 = vmatpush.bf16.msra.mxu0 %v563
      %585 = vmatpush.bf16.msra.mxu0 %v561
      %586 = vmatpush.bf16.msra.mxu0 %v559
      %587 = vmatpush.bf16.msra.mxu0 %v557
      %588 = vmatpush.bf16.msra.mxu0 %v555
      %589 = vmatpush.bf16.msra.mxu0 %v553
      %590 = vmatpush.bf16.msra.mxu0 %v551
      %591 = vmatmul.bf16.gmra.mxu0 %v485
      %v592 = vpop.f32.mrf.mxu0
      %v593 = vadd.f32 0.0, %v592
      %v594 = vpop.f32.mrf.mxu0
      %v595 = vadd.f32 0.0, %v594
      %596 = vdwg.mxu0
      %597 = vmatpush.bf16.msra.mxu0 %v566
      %598 = vmatpush.bf16.msra.mxu0 %v564
      %599 = vmatpush.bf16.msra.mxu0 %v562
      %600 = vmatpush.bf16.msra.mxu0 %v560
      %601 = vmatpush.bf16.msra.mxu0 %v558
      %602 = vmatpush.bf16.msra.mxu0 %v556
      %603 = vmatpush.bf16.msra.mxu0 %v554
      %604 = vmatpush.bf16.msra.mxu0 %v552
      %605 = vmatmul.bf16.gmra.mxu0 %v485
      %v606 = vpop.f32.mrf.mxu0
      %v607 = vadd.f32 0.0, %v606
      %v608 = vpop.f32.mrf.mxu0
      %v609 = vadd.f32 0.0, %v608
      %610 = vdwg.mxu0
      %v611 = vadd.f32 %v465, %v593
      %v612 = vadd.f32 %v479, %v607
      %v613 = vadd.f32 %v467, %v595
      %v614 = vadd.f32 %v481, %v609
      %v615 = vlaneseq
      %v616 = vshrl.u32 %v615, 7
      %v617 = vadd.s32 %v616, 8
      %vm618 = vcmp.lt.s32.totalorder %v616, 16
      %vm619 = vcmp.lt.s32.totalorder %v617, 16
      %v620 = vsel %vm618, 1, 0
      %v621 = vsel %vm619, 1, 0
      %vm622 = vcmp.eq.s32.totalorder %v620, 1
      %vm623 = vcmp.eq.s32.totalorder %v621, 1
      %v624 = vsel %vm622, %v611, 0.0
      %v625 = vsel %vm622, %v612, 0.0
      %v626 = vsel %vm623, %v613, 0.0
      %v627 = vsel %vm623, %v614, 0.0
      %v628 = vpack.c.bf16 %v625, %v624
      %v629 = vpack.c.bf16 %v627, %v626
      %630 = vst [vmem:[%s216] sm:$0xff] %v628
      %631 = vst [vmem:[%s216 + $0x8] sm:$0xff] %v629
      %v632 = vadd.f32 %v624, %v626
      %v633 = vrot.slane %v632, 4
      %v634 = vadd.f32 %v632, %v633
      %v635 = vrot.slane %v634, 2
      %v636 = vadd.f32 %v634, %v635
      %v637 = vrot.slane %v636, 1
      %v638 = vadd.f32 %v636, %v637
      %v639 = vadd.f32 %v625, %v627
      %v640 = vrot.slane %v639, 4
      %v641 = vadd.f32 %v639, %v640
      %v642 = vrot.slane %v641, 2
      %v643 = vadd.f32 %v641, %v642
      %v644 = vrot.slane %v643, 1
      %v645 = vadd.f32 %v643, %v644
      %646 = vst [vmem:[%s222] sm:$0xff] %v638
      %647 = vst [vmem:[%s222 + $0x8] sm:$0xff] %v645
      %v648 = vmul.f32 %v624, %v624
      %v649 = vmul.f32 %v625, %v625
      %v650 = vmul.f32 %v626, %v626
      %v651 = vmul.f32 %v627, %v627
      %v652 = vadd.f32 %v648, %v650
      %v653 = vrot.slane %v652, 4
      %v654 = vadd.f32 %v652, %v653
      %v655 = vrot.slane %v654, 2
      %v656 = vadd.f32 %v654, %v655
      %v657 = vrot.slane %v656, 1
      %v658 = vadd.f32 %v656, %v657
      %v659 = vadd.f32 %v649, %v651
      %v660 = vrot.slane %v659, 4
      %v661 = vadd.f32 %v659, %v660
      %v662 = vrot.slane %v661, 2
      %v663 = vadd.f32 %v661, %v662
      %v664 = vrot.slane %v663, 1
      %v665 = vadd.f32 %v663, %v664
      %666 = vst [vmem:[%s227] sm:$0xff] %v658
      %667 = vst [vmem:[%s227 + $0x8] sm:$0xff] %v665
      %s668 = smul.u32 2, %s16
      %p669 = scmp.lt.s32.totalorder %s668, 3
      %s670 = scalar_select %p669, %s668, 3
      %s671 = smul.addr %s670, 2
      %s672 = smul.addr %s671, 4
      %s673 = scalar_lea.vmem %s2, %s672
      %p674 = scmp.lt.s32.totalorder %s16, 1
      %s675 = scalar_select %p674, %s16, 1
      %s676 = smul.addr %s675, 2
      %s677 = smul.addr %s676, 8
      %s678 = scalar_lea.vmem %s3, %s677
      %p679 = scmp.lt.s32.totalorder %s16, 1
      %s680 = scalar_select %p679, %s16, 1
      %s681 = smul.addr %s680, 2
      %s682 = smul.addr %s681, 8
      %s683 = scalar_lea.vmem %s4, %s682
      // Predicated region
      $region29: #{resblock1_forward.3} parent=27 // pred_check
        %p684 = pneg %p81
      $region30: #{resblock1_forward.3} parent=27 // pred_check_branch
        %686 = sbr.rel (%p684) target = $region32
      $region31: #{resblock1_forward.3} parent=27 // pred_region
        %s687 = smul.u32 2, %s16
      $region32: #{resblock1_forward.3} parent=27 // pred_fallthru
        _
      // Predicated region
      $region33: #{resblock1_forward.3} parent=27 // pred_check
        %p688 = pneg %p107
      $region34: #{resblock1_forward.3} parent=27 // pred_check_branch
        %690 = sbr.rel (%p688) target = $region36
      $region35: #{resblock1_forward.3} parent=27 // pred_region
        _
      $region36: #{resblock1_forward.3} parent=27 // pred_fallthru
        _
      // Predicated region
      $region37: #{resblock1_forward.3} parent=27 // pred_check
        %p691 = pneg %p133
      $region38: #{resblock1_forward.3} parent=27 // pred_check_branch
        %693 = sbr.rel (%p691) target = $region40
      $region39: #{resblock1_forward.3} parent=27 // pred_region
        _
      $region40: #{resblock1_forward.3} parent=27 // pred_fallthru
        _
    $region28: #{resblock1_forward.3} parent=5 // pred_fallthru
      _
    %p694 = scmp.le.s32.totalorder 2, %s11
    // Predicated region
    $region41: #{resblock1_forward.3} parent=5 // pred_check
      %p695 = pneg %p694
    $region42: #{resblock1_forward.3} parent=5 // pred_check_branch
      %697 = sbr.rel (%p695) target = $region44
    $region43: #{resblock1_forward.3} parent=5 // pred_region
      %s698 = ssub.s32 %s11, 2
      // Predicated region
      $region45: #{resblock1_forward.3} parent=43 // pred_check
        %p699 = pneg %p87
      $region46: #{resblock1_forward.3} parent=43 // pred_check_branch
        %701 = sbr.rel (%p699) target = $region48
      $region47: #{resblock1_forward.3} parent=43 // pred_region
        %s702 = smul.u32 2, %s17
        %p703 = scmp.lt.s32.totalorder %s702, 3
        %s704 = scalar_select %p703, %s702, 3
        %s705 = smul.addr %s704, 2
        %s706 = smul.addr %s705, 4
        %s707 = scalar_lea.vmem %s2, %s706
      $region48: #{resblock1_forward.3} parent=43 // pred_fallthru
        _
      // Predicated region
      $region49: #{resblock1_forward.3} parent=43 // pred_check
        %p708 = pneg %p113
      $region50: #{resblock1_forward.3} parent=43 // pred_check_branch
        %710 = sbr.rel (%p708) target = $region52
      $region51: #{resblock1_forward.3} parent=43 // pred_region
        %p711 = scmp.lt.s32.totalorder %s17, 1
        %s712 = scalar_select %p711, %s17, 1
        %s713 = smul.addr %s712, 2
        %s714 = smul.addr %s713, 8
        %s715 = scalar_lea.vmem %s3, %s714
      $region52: #{resblock1_forward.3} parent=43 // pred_fallthru
        _
      // Predicated region
      $region53: #{resblock1_forward.3} parent=43 // pred_check
        %p716 = pneg %p139
      $region54: #{resblock1_forward.3} parent=43 // pred_check_branch
        %718 = sbr.rel (%p716) target = $region56
      $region55: #{resblock1_forward.3} parent=43 // pred_region
        %p719 = scmp.lt.s32.totalorder %s17, 1
        %s720 = scalar_select %p719, %s17, 1
        %s721 = smul.addr %s720, 2
        %s722 = smul.addr %s721, 8
        %s723 = scalar_lea.vmem %s4, %s722
      $region56: #{resblock1_forward.3} parent=43 // pred_fallthru
        _
    $region44: #{resblock1_forward.3} parent=5 // pred_fallthru
      _
  $region6: #{resblock1_forward.3} parent=0 // loop_footer
    %s15 = sadd.s32 1, %s11
  $region7: #{resblock1_forward.3} parent=0 // loop_footer_branch
    %10 = sbr.rel target = $region3
  $region8: #{resblock1_forward.3} parent=0 // loop_exit
    _

// kernel: resblock1_forward.4
$region0: #{resblock1_forward.4}
  #allocation0 [shape = 'u32[]', space=smem, size = 0x4, offset = 0x4, fixed_abs, tag = 'smem constant byte address 0x4 - core index']
  #allocation1 [shape = 'u32[72,128]{1,0:T(1,128)}', space=vmem, size = 0x9000, scoped, tag = 'internal scratch']
  %s0 = inlined_call_operand.vmem [shape: bf16[32,256], index: 0, kind: input, shape index: {}]
  %s1 = inlined_call_operand.vmem [shape: f32[1,128], index: 1, kind: input, shape index: {}]
  %s2 = inlined_call_operand.vmem [shape: f32[1,128], index: 2, kind: input, shape index: {}]
  %s3 = inlined_call_operand.vmem [shape: bf16[3,128,128], index: 3, kind: input, shape index: {}]
  %s4 = inlined_call_operand.vmem [shape: bf16[32,128], index: 4, kind: output, shape index: {0}]
  %s5 = inlined_call_operand.vmem [shape: f32[16,128], index: 5, kind: output, shape index: {1}]
  %s6 = inlined_call_operand.vmem [shape: f32[16,128], index: 6, kind: output, shape index: {2}]
  %7 = xla_tuple %s4, %s5, %s6
  %s8 = sld [smem:[#allocation0]]
  $region106: #{resblock1_forward.4} parent=0
    _
  %s10 = ssub.s32 1, %s8
  %s11 = scalar_select 0, %s10, %s8
  $region1: #{resblock1_forward.4} parent=0
    #allocation2 [shape = 'u8[8192]{0}', space=vmem, size = 0x2000, scoped, tag = 'input window, operand 0']
    loop: start=0, step=1, limit=4
    $region2: #{resblock1_forward.4} parent=1 // loop_pre_header
      _
    $region3: #{resblock1_forward.4} parent=1 // loop_header
      %s13 = sphi 0, %s17
      %p14 = scmp.ge.s32.totalorder %s13, 4
      %s23 = sphi 0, %s25
      %s26 = sphi 0, %s23
      %s27 = sphi 0, %s26
      %s43 = sphi 0, %s27
      %s47 = sphi 0, %s47
      %s49 = sphi 0, %s47
      %s50 = sphi 0, %s49
      %s64 = sphi 0, %s50
      %s68 = sphi 0, %s68
      %s70 = sphi 0, %s68
      %s71 = sphi 0, %s70
      %s85 = sphi 0, %s71
      %s89 = sphi 0, %s89
      %s91 = sphi 0, %s89
      %s92 = sphi 0, %s91
      %s106 = sphi 0, %s92
      %s112 = sphi 0, %s114
      %s115 = sphi 0, %s112
      %s116 = sphi 0, %s115
      %s132 = sphi 0, %s116
      %s138 = sphi 0, %s140
      %s141 = sphi 0, %s138
      %s142 = sphi 0, %s141
      %s158 = sphi 0, %s142
      %s164 = sphi 0, %s166
      %s167 = sphi 0, %s164
      %s168 = sphi 0, %s167
      %s184 = sphi 0, %s168
    $region4: #{resblock1_forward.4} parent=1 // loop_header_branch
      %16 = sbr.rel (%p14) target = $region8
    $region5: #{resblock1_forward.4} parent=1 // loop_body
      %s18 = ssub.s32 %s13, 1
      %s19 = ssub.s32 %s13, 2
      %s20 = sadd.s32 %s13, 1
      %s21 = ssub.s32 %s13, %s20
      %p22 = scmp.eq.s32.totalorder %s21, 0
      %s24 = sadd.s32 %s23, 1
      %s25 = scalar_select %p22, %s23, %s24
      %p28 = pneg %p22
      %p29 = scmp.eq.s32.totalorder %s13, 1
      %p30 = por %p28, %p29
      %p31 = scmp.ne.s32.totalorder %s23, %s26
      %p32 = scmp.eq.s32.totalorder %s13, 0
      %p33 = por %p31, %p32
      %p34 = scmp.ne.s32.totalorder %s23, %s26
      %p35 = scmp.eq.s32.totalorder %s18, 1
      %p36 = por %p34, %p35
      %p37 = scmp.ne.s32.totalorder %s26, %s27
      %p38 = scmp.eq.s32.totalorder %s18, 0
      %p39 = por %p37, %p38
      %p40 = scmp.ne.s32.totalorder %s26, %s27
      %p41 = scmp.eq.s32.totalorder %s19, 1
      %p42 = por %p40, %p41
      %p44 = scmp.ne.s32.totalorder %s27, %s43
      %p45 = scmp.eq.s32.totalorder %s19, 0
      %p46 = por %p44, %p45
      %s48 = sadd.s32 %s47, 1
      %p51 = scmp.eq.s32.totalorder %s13, 1
      %p52 = scmp.ne.s32.totalorder %s47, %s49
      %p53 = scmp.eq.s32.totalorder %s13, 0
      %p54 = por %p52, %p53
      %p55 = scmp.ne.s32.totalorder %s47, %s49
      %p56 = scmp.eq.s32.totalorder %s18, 1
      %p57 = por %p55, %p56
      %p58 = scmp.ne.s32.totalorder %s49, %s50
      %p59 = scmp.eq.s32.totalorder %s18, 0
      %p60 = por %p58, %p59
      %p61 = scmp.ne.s32.totalorder %s49, %s50
      %p62 = scmp.eq.s32.totalorder %s19, 1
      %p63 = por %p61, %p62
      %p65 = scmp.ne.s32.totalorder %s50, %s64
      %p66 = scmp.eq.s32.totalorder %s19, 0
      %p67 = por %p65, %p66
      %s69 = sadd.s32 %s68, 1
      %p72 = scmp.eq.s32.totalorder %s13, 1
      %p73 = scmp.ne.s32.totalorder %s68, %s70
      %p74 = scmp.eq.s32.totalorder %s13, 0
      %p75 = por %p73, %p74
      %p76 = scmp.ne.s32.totalorder %s68, %s70
      %p77 = scmp.eq.s32.totalorder %s18, 1
      %p78 = por %p76, %p77
      %p79 = scmp.ne.s32.totalorder %s70, %s71
      %p80 = scmp.eq.s32.totalorder %s18, 0
      %p81 = por %p79, %p80
      %p82 = scmp.ne.s32.totalorder %s70, %s71
      %p83 = scmp.eq.s32.totalorder %s19, 1
      %p84 = por %p82, %p83
      %p86 = scmp.ne.s32.totalorder %s71, %s85
      %p87 = scmp.eq.s32.totalorder %s19, 0
      %p88 = por %p86, %p87
      %s90 = sadd.s32 %s89, 1
      %p93 = scmp.eq.s32.totalorder %s13, 1
      %p94 = scmp.ne.s32.totalorder %s89, %s91
      %p95 = scmp.eq.s32.totalorder %s13, 0
      %p96 = por %p94, %p95
      %p97 = scmp.ne.s32.totalorder %s89, %s91
      %p98 = scmp.eq.s32.totalorder %s18, 1
      %p99 = por %p97, %p98
      %p100 = scmp.ne.s32.totalorder %s91, %s92
      %p101 = scmp.eq.s32.totalorder %s18, 0
      %p102 = por %p100, %p101
      %p103 = scmp.ne.s32.totalorder %s91, %s92
      %p104 = scmp.eq.s32.totalorder %s19, 1
      %p105 = por %p103, %p104
      %p107 = scmp.ne.s32.totalorder %s92, %s106
      %p108 = scmp.eq.s32.totalorder %s19, 0
      %p109 = por %p107, %p108
      %s110 = ssub.s32 %s13, %s20
      %p111 = scmp.eq.s32.totalorder %s110, 0
      %s113 = sadd.s32 %s112, 1
      %s114 = scalar_select %p111, %s112, %s113
      %p117 = pneg %p111
      %p118 = scmp.eq.s32.totalorder %s13, 1
      %p119 = por %p117, %p118
      %p120 = scmp.ne.s32.totalorder %s112, %s115
      %p121 = scmp.eq.s32.totalorder %s13, 0
      %p122 = por %p120, %p121
      %p123 = scmp.ne.s32.totalorder %s112, %s115
      %p124 = scmp.eq.s32.totalorder %s18, 1
      %p125 = por %p123, %p124
      %p126 = scmp.ne.s32.totalorder %s115, %s116
      %p127 = scmp.eq.s32.totalorder %s18, 0
      %p128 = por %p126, %p127
      %p129 = scmp.ne.s32.totalorder %s115, %s116
      %p130 = scmp.eq.s32.totalorder %s19, 1
      %p131 = por %p129, %p130
      %p133 = scmp.ne.s32.totalorder %s116, %s132
      %p134 = scmp.eq.s32.totalorder %s19, 0
      %p135 = por %p133, %p134
      %s136 = ssub.s32 %s13, %s20
      %p137 = scmp.eq.s32.totalorder %s136, 0
      %s139 = sadd.s32 %s138, 1
      %s140 = scalar_select %p137, %s138, %s139
      %p143 = pneg %p137
      %p144 = scmp.eq.s32.totalorder %s13, 1
      %p145 = por %p143, %p144
      %p146 = scmp.ne.s32.totalorder %s138, %s141
      %p147 = scmp.eq.s32.totalorder %s13, 0
      %p148 = por %p146, %p147
      %p149 = scmp.ne.s32.totalorder %s138, %s141
      %p150 = scmp.eq.s32.totalorder %s18, 1
      %p151 = por %p149, %p150
      %p152 = scmp.ne.s32.totalorder %s141, %s142
      %p153 = scmp.eq.s32.totalorder %s18, 0
      %p154 = por %p152, %p153
      %p155 = scmp.ne.s32.totalorder %s141, %s142
      %p156 = scmp.eq.s32.totalorder %s19, 1
      %p157 = por %p155, %p156
      %p159 = scmp.ne.s32.totalorder %s142, %s158
      %p160 = scmp.eq.s32.totalorder %s19, 0
      %p161 = por %p159, %p160
      %s162 = ssub.s32 %s13, %s20
      %p163 = scmp.eq.s32.totalorder %s162, 0
      %s165 = sadd.s32 %s164, 1
      %s166 = scalar_select %p163, %s164, %s165
      %p169 = pneg %p163
      %p170 = scmp.eq.s32.totalorder %s13, 1
      %p171 = por %p169, %p170
      %p172 = scmp.ne.s32.totalorder %s164, %s167
      %p173 = scmp.eq.s32.totalorder %s13, 0
      %p174 = por %p172, %p173
      %p175 = scmp.ne.s32.totalorder %s164, %s167
      %p176 = scmp.eq.s32.totalorder %s18, 1
      %p177 = por %p175, %p176
      %p178 = scmp.ne.s32.totalorder %s167, %s168
      %p179 = scmp.eq.s32.totalorder %s18, 0
      %p180 = por %p178, %p179
      %p181 = scmp.ne.s32.totalorder %s167, %s168
      %p182 = scmp.eq.s32.totalorder %s19, 1
      %p183 = por %p181, %p182
      %p185 = scmp.ne.s32.totalorder %s168, %s184
      %p186 = scmp.eq.s32.totalorder %s19, 0
      %p187 = por %p185, %p186
      %p188 = scmp.le.s32.totalorder 1, %s13
      %p189 = scmp.lt.s32.totalorder %s13, 3
      %p190 = pnand %p188, %p189
      %p191 = pneg %p190
      // Predicated region
      $region9: #{resblock1_forward.4} parent=5 // pred_check
        _
      $region10: #{resblock1_forward.4} parent=5 // pred_check_branch
        %193 = sbr.rel (%p190) target = $region12
      $region11: #{resblock1_forward.4} parent=5 // pred_region
        %s194 = ssub.s32 %s13, 1
        // Predicated region
        $region13: #{resblock1_forward.4} parent=11 // pred_check
          %p195 = pneg %p60
        $region14: #{resblock1_forward.4} parent=11 // pred_check_branch
          %197 = sbr.rel (%p195) target = $region16
        $region15: #{resblock1_forward.4} parent=11 // pred_region
          _
        $region16: #{resblock1_forward.4} parent=11 // pred_fallthru
          _
        // Predicated region
        $region17: #{resblock1_forward.4} parent=11 // pred_check
          %p198 = pneg %p81
        $region18: #{resblock1_forward.4} parent=11 // pred_check_branch
          %200 = sbr.rel (%p198) target = $region20
        $region19: #{resblock1_forward.4} parent=11 // pred_region
          _
        $region20: #{resblock1_forward.4} parent=11 // pred_fallthru
          _
        // Predicated region
        $region21: #{resblock1_forward.4} parent=11 // pred_check
          %p201 = pneg %p102
        $region22: #{resblock1_forward.4} parent=11 // pred_check_branch
          %203 = sbr.rel (%p201) target = $region24
        $region23: #{resblock1_forward.4} parent=11 // pred_region
          _
        $region24: #{resblock1_forward.4} parent=11 // pred_fallthru
          _
      $region12: #{resblock1_forward.4} parent=5 // pred_fallthru
        _
      %p204 = scmp.lt.s32.totalorder %s13, 2
      // Predicated region
      $region25: #{resblock1_forward.4} parent=5 // pred_check
        %p205 = pneg %p204
      $region26: #{resblock1_forward.4} parent=5 // pred_check_branch
        %207 = sbr.rel (%p205) target = $region28
      $region27: #{resblock1_forward.4} parent=5 // pred_region
        // Predicated region
        $region29: #{resblock1_forward.4} parent=27 // pred_check
          %p208 = pneg %p33
        $region30: #{resblock1_forward.4} parent=27 // pred_check_branch
          %210 = sbr.rel (%p208) target = $region32
        $region31: #{resblock1_forward.4} parent=27 // pred_region
          %s211 = sand.u32 %s23, 1
          %s212 = sand.u32 %s23, 1
          %s213 = smul.addr %s212, 8
          %s214 = scalar_lea.vmem [#allocation2], %s213
          %s215 = smul.u32 2, %s13
          %s216 = smul.addr %s215, 2
          %s217 = smul.addr %s216, 4
          %s218 = scalar_lea.vmem %s0, %s217
          // Predicated region
          $region33: #{resblock1_forward.4} parent=31 // pred_check
            _
          $region34: #{resblock1_forward.4} parent=31 // pred_check_branch
            %220 = sbr.rel (0) target = $region36
          $region35: #{resblock1_forward.4} parent=31 // pred_region
            // Predicated region
            $region37: #{resblock1_forward.4} parent=35 // pred_check
              _
            $region38: #{resblock1_forward.4} parent=35 // pred_check_branch
              %222 = sbr.rel target = $region40
            $region39: #{resblock1_forward.4} parent=35 // pred_region
              // Predicated region
              $region52: #{resblock1_forward.4} parent=39 // pred_check
                _
              $region53: #{resblock1_forward.4} parent=39 // pred_check_branch
                %240 = sbr.rel (0) target = $region55
              $region54: #{resblock1_forward.4} parent=39 // pred_region
                loop: start=0, step=1, limit=1
                $region56: #{resblock1_forward.4} parent=54 // loop_pre_header
                  _
                $region57: #{resblock1_forward.4} parent=54 // loop_header
                  %s242 = sphi 0, %s246
                  %p243 = scmp.ge.s32.totalorder %s242, 1
                  %s247 = sphi %s218, %s218
                  %s248 = sphi %s214, %s214
                $region58: #{resblock1_forward.4} parent=54 // loop_header_branch
                  %245 = sbr.rel (%p243) target = $region62
                $region59: #{resblock1_forward.4} parent=54 // loop_body
                  _
                $region60: #{resblock1_forward.4} parent=54 // loop_footer
                  %s246 = sadd.s32 1, %s242
                $region61: #{resblock1_forward.4} parent=54 // loop_footer_branch
                  %241 = sbr.rel target = $region57
                $region62: #{resblock1_forward.4} parent=54 // loop_exit
                  _
                %s250 = ssub.s32 16, 1
                loop: start=0, step=1, limit=1
                $region63: #{resblock1_forward.4} parent=54 // loop_pre_header
                  _
                $region64: #{resblock1_forward.4} parent=54 // loop_header
                  %s252 = sphi 0, %s256
                  %p253 = scmp.ge.s32.totalorder %s252, 1
                  %s257 = sphi %s218, %s218
                  %s258 = sphi %s214, %s214
                $region65: #{resblock1_forward.4} parent=54 // loop_header_branch
                  %255 = sbr.rel (%p253) target = $region69
                $region66: #{resblock1_forward.4} parent=54 // loop_body
                  %v259 = vld [vmem:[%s257] sm:%s250]
                  %260 = vst [vmem:[%s258] sm:%s250] %v259
                  %v261 = vld [vmem:[%s257 + $0x8] sm:%s250]
                  %262 = vst [vmem:[%s258 + $0x4] sm:%s250] %v261
                $region67: #{resblock1_forward.4} parent=54 // loop_footer
                  %s256 = sadd.s32 1, %s252
                $region68: #{resblock1_forward.4} parent=54 // loop_footer_branch
                  %251 = sbr.rel target = $region64
                $region69: #{resblock1_forward.4} parent=54 // loop_exit
                  _
              $region55: #{resblock1_forward.4} parent=39 // pred_fallthru
                _
            $region40: #{resblock1_forward.4} parent=35 // pred_fallthru
              _
            // Predicated region
            $region41: #{resblock1_forward.4} parent=35 // pred_check
              _
            $region42: #{resblock1_forward.4} parent=35 // pred_check_branch
              %224 = sbr.rel (0) target = $region44
            $region43: #{resblock1_forward.4} parent=35 // pred_region
              %s226 = ssub.s32 16, 1
              loop: start=0, step=1, limit=1
              $region45: #{resblock1_forward.4} parent=43 // loop_pre_header
                _
              $region46: #{resblock1_forward.4} parent=43 // loop_header
                %s228 = sphi 0, %s232
                %p229 = scmp.ge.s32.totalorder %s228, 1
                %s233 = sphi %s218, %s218
                %s234 = sphi %s214, %s214
              $region47: #{resblock1_forward.4} parent=43 // loop_header_branch
                %231 = sbr.rel (%p229) target = $region51
              $region48: #{resblock1_forward.4} parent=43 // loop_body
                %v235 = vld [vmem:[%s233] sm:%s226]
                %236 = vst [vmem:[%s234] sm:%s226] %v235
                %v237 = vld [vmem:[%s233 + $0x8] sm:%s226]
                %238 = vst [vmem:[%s234 + $0x4] sm:%s226] %v237
              $region49: #{resblock1_forward.4} parent=43 // loop_footer
                %s232 = sadd.s32 1, %s228
              $region50: #{resblock1_forward.4} parent=43 // loop_footer_branch
                %227 = sbr.rel target = $region46
              $region51: #{resblock1_forward.4} parent=43 // loop_exit
                _
            $region44: #{resblock1_forward.4} parent=35 // pred_fallthru
              _
          $region36: #{resblock1_forward.4} parent=31 // pred_fallthru
            _
          %263 = vnop
        $region32: #{resblock1_forward.4} parent=27 // pred_fallthru
          _
      $region28: #{resblock1_forward.4} parent=5 // pred_fallthru
        _
      %p264 = scmp.le.s32.totalorder 1, %s13
      %p265 = scmp.lt.s32.totalorder %s13, 3
      %p266 = pnand %p264, %p265
      %p267 = pneg %p266
      // Predicated region
      $region70: #{resblock1_forward.4} parent=5 // pred_check
        _
      $region71: #{resblock1_forward.4} parent=5 // pred_check_branch
        %269 = sbr.rel (%p266) target = $region73
      $region72: #{resblock1_forward.4} parent=5 // pred_region
        %s270 = ssub.s32 %s13, 1
        %s271 = sand.u32 %s26, 1
        %s272 = sand.u32 %s26, 1
        %s273 = smul.addr %s272, 8
        %s274 = scalar_lea.vmem [#allocation2], %s273
        // Predicated region
        $region74: #{resblock1_forward.4} parent=72 // pred_check
          %p275 = pneg %p39
        $region75: #{resblock1_forward.4} parent=72 // pred_check_branch
          %277 = sbr.rel (%p275) target = $region77
        $region76: #{resblock1_forward.4} parent=72 // pred_region
          _
        $region77: #{resblock1_forward.4} parent=72 // pred_fallthru
          _
        %s278 = sand.u32 %s26, 1
        %s279 = sand.u32 %s26, 1
        %s280 = smul.addr %s279, 8
        %s281 = scalar_lea.vmem [#allocation2], %s280
        %p282 = pneg %p39
        %p283 = pneg %p36
        %p284 = pneg %p60
        %p285 = pneg %p57
        %p286 = pneg %p81
        %p287 = pneg %p78
        %p288 = pneg %p102
        %p289 = pneg %p99
        %p290 = pneg %p128
        %p291 = pneg %p125
        %s292 = smul.u32 2, %s18
        %p293 = scmp.lt.s32.totalorder %s292, 3
        %s294 = scalar_select %p293, %s292, 3
        %s295 = smul.addr %s294, 4
        %s296 = scalar_lea.vmem %s4, %s295
        %p297 = pneg %p154
        %p298 = pneg %p151
        %p299 = scmp.lt.s32.totalorder %s18, 1
        %s300 = scalar_select %p299, %s18, 1
        %s301 = smul.addr %s300, 8
        %s302 = scalar_lea.vmem %s5, %s301
        %p303 = pneg %p180
        %p304 = pneg %p177
        %p305 = scmp.lt.s32.totalorder %s18, 1
        %s306 = scalar_select %p305, %s18, 1
        %s307 = smul.addr %s306, 8
        %s308 = scalar_lea.vmem %s6, %s307
        %s309 = smul.u32 2, %s18
        %s310 = smul.u32 2, %s18
        %p311 = scmp.lt.s32.totalorder %s310, 3
        %s312 = scalar_select %p311, %s310, 3
        %s313 = smul.addr %s312, 4
        %s314 = scalar_lea.vmem %s4, %s313
        %s315 = smul.u32 2, %s18
        %p316 = scmp.lt.s32.totalorder %s18, 1
        %s317 = scalar_select %p316, %s18, 1
        %s318 = smul.addr %s317, 8
        %s319 = scalar_lea.vmem %s5, %s318
        %p320 = scmp.lt.s32.totalorder %s18, 1
        %s321 = scalar_select %p320, %s18, 1
        %s322 = smul.addr %s321, 8
        %s323 = scalar_lea.vmem %s6, %s322
        %v324 = vlaneseq
        %v325 = vshrl.u32 %v324, 7
        %v326 = vadd.s32 %v325, 8
        %v327 = vld [vmem:[%s274] sm:$0xf]
        %v328 = vld [vmem:[%s274 + $0x4] sm:$0xf]
        %v329 = vunpack.c.l.bf16 %v327
        %v330 = vunpack.c.l.bf16 %v328
        %v331 = vld [vmem:[%s1] sm:$0x1]
        %v333 = vperm.slane %v331, 0
        %v335 = vmul.f32 %v329, %v333
        %v336 = vmul.f32 %v330, %v333
        %v337 = vld [vmem:[%s2] sm:$0x1]
        %v339 = vperm.slane %v337, 0
        %v341 = vadd.f32 %v335, %v339
        %v342 = vadd.f32 %v336, %v339
        %v343 = vmax.f32 %v341, 0.0
        %v344 = vmax.f32 %v342, 0.0
        %vm345 = vcmp.lt.s32.totalorder %v325, 16
        %vm346 = vcmp.lt.s32.totalorder %v326, 16
        %v347 = vsel %vm345, 1, 0
        %v348 = vsel %vm346, 1, 0
        %vm349 = vcmp.eq.s32.totalorder %v347, 1
        %vm350 = vcmp.eq.s32.totalorder %v348, 1
        %v351 = vsel %vm349, %v343, 0.0
        %v352 = vsel %vm350, %v344, 0.0
        %vm353 = vcmp.ge.s32.totalorder %v325, 1
        %vm354 = vcmp.ge.s32.totalorder %v326, 1
        %v355 = vrot.slane %v351, 7
        %v356 = vrot.slane %v352, 7
        %vm357 = vcmp.lt.s32.totalorder %v325, 1
        %v358 = vsel %vm357, %v355, %v356
        %v359 = vsel %vm357, %v356, %v355
        %v360 = vsel %vm353, 1, 0
        %v361 = vsel %vm354, 1, 0
        %vm362 = vcmp.eq.s32.totalorder %v360, 1
        %vm363 = vcmp.eq.s32.totalorder %v361, 1
        %v364 = vsel %vm362, %v359, 0.0
        %v365 = vsel %vm363, %v358, 0.0
        %v366 = vpack.c.bf16 %v365, %v364
        %v367 = vpack.c.bf16 %v352, %v351
        %v368 = vadd.s32 %v325, 1
        %v369 = vadd.s32 %v326, 1
        %vm370 = vcmp.lt.s32.totalorder %v368, 16
        %vm371 = vcmp.lt.s32.totalorder %v369, 16
        %v372 = vrot.slane %v351, 1
        %v373 = vrot.slane %v352, 1
        %vm374 = vcmp.lt.s32.totalorder %v325, 7
        %v375 = vsel %vm374, %v372, %v373
        %v376 = vsel %vm374, %v373, %v372
        %v377 = vsel %vm370, 1, 0
        %v378 = vsel %vm371, 1, 0
        %vm379 = vcmp.eq.s32.totalorder %v377, 1
        %vm380 = vcmp.eq.s32.totalorder %v378, 1
        %v381 = vsel %vm379, %v375, 0.0
        %v382 = vsel %vm380, %v376, 0.0
        %v383 = vpack.c.bf16 %v382, %v381
        %v384 = vld [vmem:[%s3] sm:$0xf]
        %v385 = vld [vmem:[%s3 + $0x4] sm:$0xf]
        %v386 = vld [vmem:[%s3 + $0x8] sm:$0xf]
        %v387 = vld [vmem:[%s3 + $0xc] sm:$0xf]
        %v388 = vld [vmem:[%s3 + $0x10] sm:$0xf]
        %v389 = vld [vmem:[%s3 + $0x14] sm:$0xf]
        %v390 = vld [vmem:[%s3 + $0x18] sm:$0xf]
        %v391 = vld [vmem:[%s3 + $0x1c] sm:$0xf]
        %v392 = vld [vmem:[%s3 + $0x20] sm:$0xf]
        %v393 = vld [vmem:[%s3 + $0x24] sm:$0xf]
        %v394 = vld [vmem:[%s3 + $0x28] sm:$0xf]
        %v395 = vld [vmem:[%s3 + $0x2c] sm:$0xf]
        %v396 = vld [vmem:[%s3 + $0x30] sm:$0xf]
        %v397 = vld [vmem:[%s3 + $0x34] sm:$0xf]
        %v398 = vld [vmem:[%s3 + $0x38] sm:$0xf]
        %v399 = vld [vmem:[%s3 + $0x3c] sm:$0xf]
        %s400 = scalar_lea.vmem %s3, 64
        %v401 = vld [vmem:[%s400] sm:$0xf]
        %v402 = vld [vmem:[%s400 + $0x4] sm:$0xf]
        %v403 = vld [vmem:[%s400 + $0x8] sm:$0xf]
        %v404 = vld [vmem:[%s400 + $0xc] sm:$0xf]
        %v405 = vld [vmem:[%s400 + $0x10] sm:$0xf]
        %v406 = vld [vmem:[%s400 + $0x14] sm:$0xf]
        %v407 = vld [vmem:[%s400 + $0x18] sm:$0xf]
        %v408 = vld [vmem:[%s400 + $0x1c] sm:$0xf]
        %v409 = vld [vmem:[%s400 + $0x20] sm:$0xf]
        %v410 = vld [vmem:[%s400 + $0x24] sm:$0xf]
        %v411 = vld [vmem:[%s400 + $0x28] sm:$0xf]
        %v412 = vld [vmem:[%s400 + $0x2c] sm:$0xf]
        %v413 = vld [vmem:[%s400 + $0x30] sm:$0xf]
        %v414 = vld [vmem:[%s400 + $0x34] sm:$0xf]
        %v415 = vld [vmem:[%s400 + $0x38] sm:$0xf]
        %v416 = vld [vmem:[%s400 + $0x3c] sm:$0xf]
        %v433 = vunpack.c.l.b16 %v401
        %v434 = vunpack.c.l.b16 %v402
        %v435 = vunpack.c.l.b16 %v403
        %v436 = vunpack.c.l.b16 %v404
        %v437 = vunpack.c.l.b16 %v405
        %v438 = vunpack.c.l.b16 %v406
        %v439 = vunpack.c.l.b16 %v407
        %v440 = vunpack.c.l.b16 %v408
        %v441 = vunpack.c.l.b16 %v409
        %v442 = vunpack.c.l.b16 %v410
        %v443 = vunpack.c.l.b16 %v411
        %v444 = vunpack.c.l.b16 %v412
        %v445 = vunpack.c.l.b16 %v413
        %v446 = vunpack.c.l.b16 %v414
        %v447 = vunpack.c.l.b16 %v415
        %v448 = vunpack.c.l.b16 %v416
        %v449 = vpack.c.b16 %v434, %v433
        %v450 = vpack.c.b16 %v436, %v435
        %v451 = vpack.c.b16 %v438, %v437
        %v452 = vpack.c.b16 %v440, %v439
        %v453 = vpack.c.b16 %v442, %v441
        %v454 = vpack.c.b16 %v444, %v443
        %v455 = vpack.c.b16 %v446, %v445
        %v456 = vpack.c.b16 %v448, %v447
        %465 = vmatpush.bf16.msra.mxu0 %v456
        %466 = vmatpush.bf16.msra.mxu0 %v455
        %467 = vmatpush.bf16.msra.mxu0 %v454
        %468 = vmatpush.bf16.msra.mxu0 %v453
        %469 = vmatpush.bf16.msra.mxu0 %v452
        %470 = vmatpush.bf16.msra.mxu0 %v451
        %471 = vmatpush.bf16.msra.mxu0 %v450
        %472 = vmatpush.bf16.msra.mxu0 %v449
        %473 = vmatmul.bf16.gmra.mxu0 %v367
        %v474 = vpop.f32.mrf.mxu0
        %v475 = vadd.f32 0.0, %v474
        %v476 = vpop.f32.mrf.mxu0
        %v477 = vadd.f32 0.0, %v476
        %478 = vdwg.mxu0
        %v495 = vunpack.c.l.b16 %v384
        %v496 = vunpack.c.l.b16 %v385
        %v497 = vunpack.c.l.b16 %v386
        %v498 = vunpack.c.l.b16 %v387
        %v499 = vunpack.c.l.b16 %v388
        %v500 = vunpack.c.l.b16 %v389
        %v501 = vunpack.c.l.b16 %v390
        %v502 = vunpack.c.l.b16 %v391
        %v503 = vunpack.c.l.b16 %v392
        %v504 = vunpack.c.l.b16 %v393
        %v505 = vunpack.c.l.b16 %v394
        %v506 = vunpack.c.l.b16 %v395
        %v507 = vunpack.c.l.b16 %v396
        %v508 = vunpack.c.l.b16 %v397
        %v509 = vunpack.c.l.b16 %v398
        %v510 = vunpack.c.l.b16 %v399
        %v511 = vpack.c.b16 %v496, %v495
        %v512 = vpack.c.b16 %v498, %v497
        %v513 = vpack.c.b16 %v500, %v499
        %v514 = vpack.c.b16 %v502, %v501
        %v515 = vpack.c.b16 %v504, %v503
        %v516 = vpack.c.b16 %v506, %v505
        %v517 = vpack.c.b16 %v508, %v507
        %v518 = vpack.c.b16 %v510, %v509
        %527 = vmatpush.bf16.msra.mxu0 %v518
        %528 = vmatpush.bf16.msra.mxu0 %v517
        %529 = vmatpush.bf16.msra.mxu0 %v516
        %530 = vmatpush.bf16.msra.mxu0 %v515
        %531 = vmatpush.bf16.msra.mxu0 %v514
        %532 = vmatpush.bf16.msra.mxu0 %v513
        %533 = vmatpush.bf16.msra.mxu0 %v512
        %534 = vmatpush.bf16.msra.mxu0 %v511
        %535 = vmatmul.bf16.gmra.mxu0 %v366
        %v536 = vpop.f32.mrf.mxu0
        %v537 = vadd.f32 %v475, %v536
        %v538 = vpop.f32.mrf.mxu0
        %v539 = vadd.f32 %v477, %v538
        %540 = vdwg.mxu0
        %s541 = scalar_lea.vmem %s3, 128
        %v542 = vld [vmem:[%s541] sm:$0xf]
        %v543 = vld [vmem:[%s541 + $0x4] sm:$0xf]
        %v544 = vld [vmem:[%s541 + $0x8] sm:$0xf]
        %v545 = vld [vmem:[%s541 + $0xc] sm:$0xf]
        %v546 = vld [vmem:[%s541 + $0x10] sm:$0xf]
        %v547 = vld [vmem:[%s541 + $0x14] sm:$0xf]
        %v548 = vld [vmem:[%s541 + $0x18] sm:$0xf]
        %v549 = vld [vmem:[%s541 + $0x1c] sm:$0xf]
        %v550 = vld [vmem:[%s541 + $0x20] sm:$0xf]
        %v551 = vld [vmem:[%s541 + $0x24] sm:$0xf]
        %v552 = vld [vmem:[%s541 + $0x28] sm:$0xf]
        %v553 = vld [vmem:[%s541 + $0x2c] sm:$0xf]
        %v554 = vld [vmem:[%s541 + $0x30] sm:$0xf]
        %v555 = vld [vmem:[%s541 + $0x34] sm:$0xf]
        %v556 = vld [vmem:[%s541 + $0x38] sm:$0xf]
        %v557 = vld [vmem:[%s541 + $0x3c] sm:$0xf]
        %v574 = vunpack.c.l.b16 %v542
        %v575 = vunpack.c.l.b16 %v543
        %v576 = vunpack.c.l.b16 %v544
        %v577 = vunpack.c.l.b16 %v545
        %v578 = vunpack.c.l.b16 %v546
        %v579 = vunpack.c.l.b16 %v547
        %v580 = vunpack.c.l.b16 %v548
        %v581 = vunpack.c.l.b16 %v549
        %v582 = vunpack.c.l.b16 %v550
        %v583 = vunpack.c.l.b16 %v551
        %v584 = vunpack.c.l.b16 %v552
        %v585 = vunpack.c.l.b16 %v553
        %v586 = vunpack.c.l.b16 %v554
        %v587 = vunpack.c.l.b16 %v555
        %v588 = vunpack.c.l.b16 %v556
        %v589 = vunpack.c.l.b16 %v557
        %v590 = vpack.c.b16 %v575, %v574
        %v591 = vpack.c.b16 %v577, %v576
        %v592 = vpack.c.b16 %v579, %v578
        %v593 = vpack.c.b16 %v581, %v580
        %v594 = vpack.c.b16 %v583, %v582
        %v595 = vpack.c.b16 %v585, %v584
        %v596 = vpack.c.b16 %v587, %v586
        %v597 = vpack.c.b16 %v589, %v588
        %606 = vmatpush.bf16.msra.mxu0 %v597
        %607 = vmatpush.bf16.msra.mxu0 %v596
        %608 = vmatpush.bf16.msra.mxu0 %v595
        %609 = vmatpush.bf16.msra.mxu0 %v594
        %610 = vmatpush.bf16.msra.mxu0 %v593
        %611 = vmatpush.bf16.msra.mxu0 %v592
        %612 = vmatpush.bf16.msra.mxu0 %v591
        %613 = vmatpush.bf16.msra.mxu0 %v590
        %614 = vmatmul.bf16.gmra.mxu0 %v383
        %v615 = vpop.f32.mrf.mxu0
        %v616 = vadd.f32 0.0, %v615
        %v617 = vpop.f32.mrf.mxu0
        %v618 = vadd.f32 0.0, %v617
        %619 = vdwg.mxu0
        %v620 = vadd.f32 %v537, %v616
        %v621 = vadd.f32 %v539, %v618
        %v622 = vsel %vm349, %v620, 0.0
        %v623 = vsel %vm350, %v621, 0.0
        %v624 = vpack.c.bf16 %v622, %v622
        %v625 = vpack.c.bf16 %v623, %v623
        %626 = vst [vmem:[%s314] sm:$0xf] %v624
        %627 = vst [vmem:[%s314 + $0x4] sm:$0xf] %v625
        %v628 = vadd.f32 %v622, %v623
        %v629 = vrot.slane %v628, 4
        %v630 = vadd.f32 %v628, %v629
        %v631 = vrot.slane %v630, 2
        %v632 = vadd.f32 %v630, %v631
        %v633 = vrot.slane %v632, 1
        %v634 = vadd.f32 %v632, %v633
        %635 = vst [vmem:[%s319] sm:$0xff] %v634
        %v636 = vmul.f32 %v622, %v622
        %v637 = vmul.f32 %v623, %v623
        %v638 = vadd.f32 %v636, %v637
        %v639 = vrot.slane %v638, 4
        %v640 = vadd.f32 %v638, %v639
        %v641 = vrot.slane %v640, 2
        %v642 = vadd.f32 %v640, %v641
        %v643 = vrot.slane %v642, 1
        %v644 = vadd.f32 %v642, %v643
        %645 = vst [vmem:[%s323] sm:$0xff] %v644
        %s646 = smul.u32 2, %s18
        %p647 = scmp.lt.s32.totalorder %s646, 3
        %s648 = scalar_select %p647, %s646, 3
        %s649 = smul.addr %s648, 4
        %s650 = scalar_lea.vmem %s4, %s649
        %p651 = scmp.lt.s32.totalorder %s18, 1
        %s652 = scalar_select %p651, %s18, 1
        %s653 = smul.addr %s652, 8
        %s654 = scalar_lea.vmem %s5, %s653
        %p655 = scmp.lt.s32.totalorder %s18, 1
        %s656 = scalar_select %p655, %s18, 1
        %s657 = smul.addr %s656, 8
        %s658 = scalar_lea.vmem %s6, %s657
        // Predicated region
        $region78: #{resblock1_forward.4} parent=72 // pred_check
          %p659 = pneg %p125
        $region79: #{resblock1_forward.4} parent=72 // pred_check_branch
          %661 = sbr.rel (%p659) target = $region81
        $region80: #{resblock1_forward.4} parent=72 // pred_region
          %s662 = smul.u32 2, %s18
        $region81: #{resblock1_forward.4} parent=72 // pred_fallthru
          _
        // Predicated region
        $region82: #{resblock1_forward.4} parent=72 // pred_check
          %p663 = pneg %p151
        $region83: #{resblock1_forward.4} parent=72 // pred_check_branch
          %665 = sbr.rel (%p663) target = $region85
        $region84: #{resblock1_forward.4} parent=72 // pred_region
          _
        $region85: #{resblock1_forward.4} parent=72 // pred_fallthru
          _
        // Predicated region
        $region86: #{resblock1_forward.4} parent=72 // pred_check
          %p666 = pneg %p177
        $region87: #{resblock1_forward.4} parent=72 // pred_check_branch
          %668 = sbr.rel (%p666) target = $region89
        $region88: #{resblock1_forward.4} parent=72 // pred_region
          _
        $region89: #{resblock1_forward.4} parent=72 // pred_fallthru
          _
      $region73: #{resblock1_forward.4} parent=5 // pred_fallthru
        _
      %p669 = scmp.le.s32.totalorder 2, %s13
      // Predicated region
      $region90: #{resblock1_forward.4} parent=5 // pred_check
        %p670 = pneg %p669
      $region91: #{resblock1_forward.4} parent=5 // pred_check_branch
        %672 = sbr.rel (%p670) target = $region93
      $region92: #{resblock1_forward.4} parent=5 // pred_region
        %s673 = ssub.s32 %s13, 2
        // Predicated region
        $region94: #{resblock1_forward.4} parent=92 // pred_check
          %p674 = pneg %p131
        $region95: #{resblock1_forward.4} parent=92 // pred_check_branch
          %676 = sbr.rel (%p674) target = $region97
        $region96: #{resblock1_forward.4} parent=92 // pred_region
          %s677 = smul.u32 2, %s19
          %p678 = scmp.lt.s32.totalorder %s677, 3
          %s679 = scalar_select %p678, %s677, 3
          %s680 = smul.addr %s679, 4
          %s681 = scalar_lea.vmem %s4, %s680
        $region97: #{resblock1_forward.4} parent=92 // pred_fallthru
          _
        // Predicated region
        $region98: #{resblock1_forward.4} parent=92 // pred_check
          %p682 = pneg %p157
        $region99: #{resblock1_forward.4} parent=92 // pred_check_branch
          %684 = sbr.rel (%p682) target = $region101
        $region100: #{resblock1_forward.4} parent=92 // pred_region
          %p685 = scmp.lt.s32.totalorder %s19, 1
          %s686 = scalar_select %p685, %s19, 1
          %s687 = smul.addr %s686, 8
          %s688 = scalar_lea.vmem %s5, %s687
        $region101: #{resblock1_forward.4} parent=92 // pred_fallthru
          _
        // Predicated region
        $region102: #{resblock1_forward.4} parent=92 // pred_check
          %p689 = pneg %p183
        $region103: #{resblock1_forward.4} parent=92 // pred_check_branch
          %691 = sbr.rel (%p689) target = $region105
        $region104: #{resblock1_forward.4} parent=92 // pred_region
          %p692 = scmp.lt.s32.totalorder %s19, 1
          %s693 = scalar_select %p692, %s19, 1
          %s694 = smul.addr %s693, 8
          %s695 = scalar_lea.vmem %s6, %s694
        $region105: #{resblock1_forward.4} parent=92 // pred_fallthru
          _
      $region93: #{resblock1_forward.4} parent=5 // pred_fallthru
        _
    $region6: #{resblock1_forward.4} parent=1 // loop_footer
      %s17 = sadd.s32 1, %s13
    $region7: #{resblock1_forward.4} parent=1 // loop_footer_branch
      %12 = sbr.rel target = $region3
    $region8: #{resblock1_forward.4} parent=1 // loop_exit
      _

</llo_original>
